<compile_context>
chip_gen: v5e
topology: v5e:2x2
jax: 0.10.0
libtpu: 0.0.40
codegen_flags: <defaults>
</compile_context>

<pallas_src>
import numpy as np
import jax
import jax.numpy as jnp
from jax import lax
from jax.experimental import pallas as pl
from jax.experimental.pallas import tpu as pltpu


def _device_budgets():
    """(vmem_limit_bytes, target x-block bytes) for the local TPU generation."""
    kind = ""
    try:
        kind = jax.devices()[0].device_kind.lower()
    except Exception:  # pragma: no cover - defensive
        pass
    if "v5" in kind or "v6" in kind:
        # 128 MiB physical VMEM: allow big double-buffered blocks.
        return 80 * 1024 * 1024, 6 * 1024 * 1024
    # v7x (64 MiB VMEM / TensorCore) and unknown parts: stay conservative.
    return 44 * 1024 * 1024, 3 * 1024 * 1024


def _tap_shifts_and_masks(H, W, nb, sub_rows):
    """Lane-roll shift (mod nb*H*W), all-valid flag and 0/1 mask per 3x3 tap."""
    HW = H * W
    L = nb * HW
    hh, ww = np.meshgrid(np.arange(H), np.arange(W), indexing="ij")
    shifts, full, rows = [], [], []
    for dh in (-1, 0, 1):                       # tap order matches OIHW kh, kw
        for dw in (-1, 0, 1):
            d = dh * W + dw                     # flat source offset of this tap
            shifts.append(int((-d) % L))        # jnp.roll-style positive shift
            valid = ((hh + dh >= 0) & (hh + dh < H) &
                     (ww + dw >= 0) & (ww + dw < W))
            full.append(bool(valid.all()))
            rows.append(valid.reshape(-1))
    m = np.stack(rows).astype(np.float32)       # (9, HW)
    m = np.repeat(m[:, None, :], sub_rows, axis=1)   # replicate over sublanes
    m = np.tile(m, (1, 1, nb))                  # tile once per folded image
    return shifts, full, m                      # m: (9, sub_rows, nb*HW)


def _make_kernel(C, L, shifts, tap_full, has_gate, gate_compact, use_mxu):
    def kernel(*refs):
        x_ref, mask_ref, w1_ref, b1_ref, w2_ref, b2_ref = refs[:6]
        pos = 6
        gate_ref = None
        if has_gate:
            gate_ref = refs[pos]
            pos += 1
        out_ref = refs[pos]
        pos += 1
        stack_ref = refs[pos] if use_mxu else None

        def shifted(v, t):
            # Tap t of the 3x3 stencil = lane rotation (XLU) of the folded slab
            # times the precomputed 0/1 border mask (VPU).  Valid taps never
            # cross per-image lane boundaries; invalid ones are zeroed.
            if shifts[t] == 0 and tap_full[t]:
                return v
            s = v if shifts[t] == 0 else pltpu.roll(v, shifts[t], axis=1)
            return s * mask_ref[t]

        def conv3x3(v, w_ref, b_ref):
            if use_mxu:
                # im2col: stack the 9 shifted+masked slabs, then one
                # (C, 9C) x (9C, L) MXU matmul per conv (instead of 9 K=C dots).
                for t in range(9):
                    stack_ref[t * C:(t + 1) * C, :] = shifted(v, t)
                acc = jnp.dot(w_ref[...], stack_ref[...],
                              preferred_element_type=jnp.float32)
            else:
                # Small C: exact-f32 VPU broadcast outer products; each weight
                # column / mask is used exactly once per conv (no per-image
                # re-broadcasts thanks to the lane fold).
                acc = jnp.zeros((C, L), jnp.float32)
                for t in range(9):
                    s = shifted(v, t)
                    for ci in range(C):
                        k = t * C + ci
                        acc = acc + w_ref[:, k:k + 1] * s[ci:ci + 1, :]
            return acc + b_ref[...]

        xv = x_ref[0].astype(jnp.float32)                        # (C, L)
        h = jnp.maximum(conv3x3(xv, w1_ref, b1_ref), 0.0)
        res = conv3x3(h, w2_ref, b2_ref)
        if has_gate:
            if gate_compact:
                res = res * gate_ref[...]                        # (C, 1) gate
            else:
                res = res * gate_ref[0].astype(jnp.float32)      # streamed gate
        out_ref[0] = (xv + res).astype(out_ref.dtype)            # lane-dense store

    return kernel


def residual_denoiser(x, w1, b1, w2, b2, gate=None, *, use_mxu=None):
    """x: (N,C,H,W). w*: (C,C,3,3) OIHW. b*: (C,). gate: None, x-shaped or a
    scalar / per-channel ((C,1,1) or (1,C,1,1)) gating signal."""
    N, C, H, W = x.shape
    HW = H * W
    if use_mxu is None:
        use_mxu = C >= 16        # im2col + single MXU matmul pays off for larger C

    has_gate = gate is not None
    gate_compact = False
    g_small = g_full = None
    if has_gate:
        g = jnp.asarray(gate)
        if g.size == 1 or tuple(g.shape) in ((C, 1, 1), (1, C, 1, 1)):
            gate_compact = True
            g_small = jnp.reshape(g, (-1, 1)).astype(jnp.float32)
            if g_small.shape[0] != C:
                g_small = jnp.broadcast_to(g_small, (C, 1))
        else:
            # TODO(synk): support more compact broadcast patterns without
            # materializing an x-shaped gate.
            g_full = jnp.broadcast_to(g, x.shape).astype(x.dtype)

    # ---- block sizing: fold nb images into the lane axis ---------------------
    vmem_limit, x_block_target = _device_budgets()
    itemsize = np.dtype(x.dtype).itemsize
    x_img = C * HW * itemsize
    sub_rows = C if C <= 8 else 1          # host-side mask sublane replication
    n_streams = 2 + (1 if (has_gate and not gate_compact) else 0)
    per_img_vmem = (2 * n_streams * x_img                 # double-buffered streams
                    + 2 * 9 * sub_rows * HW * 4           # resident border masks
                    + (9 * C * HW * 4 if use_mxu else 0)) # im2col scratch
    fixed = 4 * (9 * C * C * 4) + 4 * C * 4 + (1 << 20)   # weights/biases + slack
    budget = max(int(0.6 * vmem_limit) - fixed, per_img_vmem)
    nb = max(1, min(x_block_target // max(x_img, 1),
                    budget // max(per_img_vmem, 1)))
    nb = min(nb, N)
    if N >= 2:
        nb = min(nb, (N + 1) // 2)   # grid length >= 2 keeps both v7x TCs busy
    nb = max(nb, 1)

    G = -(-N // nb)                  # ceil-div grid; pad N instead of requiring
    N_pad = G * nb                   # a divisor
    L = nb * HW

    shifts, tap_full, masks_np = _tap_shifts_and_masks(H, W, nb, sub_rows)
    masks = jnp.asarray(masks_np)

    def prep_w(w):   # OIHW -> (C, 9C); column k = (kh*3+kw)*C + ci
        return jnp.transpose(jnp.asarray(w, jnp.float32),
                             (0, 2, 3, 1)).reshape(C, 9 * C)

    w1p, w2p = prep_w(w1), prep_w(w2)
    b1p = jnp.asarray(b1, jnp.float32).reshape(C, 1)
    b2p = jnp.asarray(b2, jnp.float32).reshape(C, 1)

    def pad_n(a):
        return a if N_pad == N else jnp.pad(a, ((0, N_pad - N),) + ((0, 0),) * 3)

    def fold(a):     # (N_pad,C,H,W) -> (G, C, nb*HW): images side by side on lanes
        return jnp.transpose(a.reshape(G, nb, C, HW), (0, 2, 1, 3)).reshape(G, C, L)

    img_spec = pl.BlockSpec((1, C, L), lambda i: (i, 0, 0))
    small_spec = pl.BlockSpec((C, 1), lambda i: (0, 0))
    w_spec = pl.BlockSpec((C, 9 * C), lambda i: (0, 0))
    mask_spec = pl.BlockSpec((9, sub_rows, L), lambda i: (0, 0, 0))

    in_specs = [img_spec, mask_spec, w_spec, small_spec, w_spec, small_spec]
    args = [fold(pad_n(x)), masks, w1p, b1p, w2p, b2p]
    if has_gate:
        if gate_compact:
            in_specs.append(small_spec)
            args.append(g_small)
        else:
            in_specs.append(img_spec)
            args.append(fold(pad_n(g_full)))

    scratch = [pltpu.VMEM((9 * C, L), jnp.float32)] if use_mxu else []
    kernel = _make_kernel(C, L, shifts, tap_full, has_gate, gate_compact, use_mxu)

    out = pl.pallas_call(
        kernel,
        out_shape=jax.ShapeDtypeStruct((G, C, L), x.dtype),
        grid=(G,),
        in_specs=in_specs,
        out_specs=img_spec,
        scratch_shapes=scratch,
        compiler_params=pltpu.CompilerParams(
            dimension_semantics=("parallel",),
            vmem_limit_bytes=vmem_limit),
    )(*args)

    out = jnp.transpose(out.reshape(G, C, nb, HW),
                        (0, 2, 1, 3)).reshape(N_pad, C, H, W)
    return out[:N]


def _reference(x, w1, b1, w2, b2, gate=None):
    dn = lax.conv_dimension_numbers(x.shape, w1.shape, ("NCHW", "OIHW", "NCHW"))

    def conv(a, w):
        return lax.conv_general_dilated(a, w, (1, 1), ((1, 1), (1, 1)),
                                        dimension_numbers=dn,
                                        precision=lax.Precision.HIGHEST)

    h = jnp.maximum(conv(x, w1) + b1[None, :, None, None], 0.0)
    r = conv(h, w2) + b2[None, :, None, None]
    if gate is not None:
        r = r * gate
    return x + r


if __name__ == "__main__":
    key = jax.random.PRNGKey(0)

    def make_params(k, C):
        kw1, kb1, kw2, kb2 = jax.random.split(k, 4)
        s = 1.0 / np.sqrt(C * 9)
        w1 = jax.random.uniform(kw1, (C, C, 3, 3), jnp.float32, -s, s)
        b1 = jax.random.uniform(kb1, (C,), jnp.float32, -s, s)
        w2 = jax.random.uniform(kw2, (C, C, 3, 3), jnp.float32, -s, s)
        b2 = jax.random.uniform(kb2, (C,), jnp.float32, -s, s)
        return w1, b1, w2, b2

    def check(name, out, ref, tol):
        out = jax.block_until_ready(out)
        if not bool(jnp.allclose(out, ref, atol=tol, rtol=tol)):
            err = float(jnp.max(jnp.abs(out - ref)))
            raise AssertionError(f"{name} mismatch, max abs err = {err}")

    H, W = 16, 16
    kx, kg, kx2, kg2, kx3, kg3, kp, kp3 = jax.random.split(key, 8)

    # --- small-C VPU path (the module's reference shapes), nb = 1 -------------
    N, C = 2, 4
    w1, b1, w2, b2 = make_params(kp, C)
    x = jax.random.normal(kx, (N, C, H, W), jnp.float32)
    gate = jax.random.uniform(kg, (N, C, H, W), jnp.float32)
    check("no-gate", residual_denoiser(x, w1, b1, w2, b2),
          _reference(x, w1, b1, w2, b2), 1e-5)
    check("gated", residual_denoiser(x, w1, b1, w2, b2, gate=gate),
          _reference(x, w1, b1, w2, b2, gate=gate), 1e-5)

    # --- lane-folded batch (nb > 1) with N not divisible by nb (padding) ------
    N2 = 5
    x2 = jax.random.normal(kx2, (N2, C, H, W), jnp.float32)
    gate2 = jax.random.uniform(kg2, (N2, C, H, W), jnp.float32)
    check("folded", residual_denoiser(x2, w1, b1, w2, b2, gate=gate2),
          _reference(x2, w1, b1, w2, b2, gate=gate2), 1e-5)

    # --- larger C: im2col single-matmul MXU path + compact per-channel gate ---
    N3, C3 = 4, 32
    w1c, b1c, w2c, b2c = make_params(kp3, C3)
    x3 = jax.random.normal(kx3, (N3, C3, H, W), jnp.float32)
    gate3 = jax.random.uniform(kg3, (1, C3, 1, 1), jnp.float32)
    # MXU matmul precision may be below exact f32 -> loose tolerance here.
    check("mxu", residual_denoiser(x3, w1c, b1c, w2c, b2c, gate=gate3),
          _reference(x3, w1c, b1c, w2c, b2c, gate=gate3), 2e-2)

    print("KERNEL_OK")
</pallas_src>

<mosaic_0001>
module attributes {stable_mosaic.version = 11 : i64} {
  func.func @kernel(%arg0: i32, %arg1: memref<1x4x256xf32, #tpu.memory_space<vmem>>, %arg2: memref<9x4x256xf32, #tpu.memory_space<vmem>>, %arg3: memref<4x36xf32, #tpu.memory_space<vmem>>, %arg4: memref<4x1xf32, #tpu.memory_space<vmem>>, %arg5: memref<4x36xf32, #tpu.memory_space<vmem>>, %arg6: memref<4x1xf32, #tpu.memory_space<vmem>>, %arg7: memref<1x4x256xf32, #tpu.memory_space<vmem>>) attributes {dimension_semantics = [#tpu.dimension_semantics<parallel>], iteration_bounds = array<i64: 2>, scalar_prefetch = 0 : i64, scratch_operands = 0 : i64, tpu.core_type = #tpu.core_type<tc>, window_params = [{transform_indices = @transform_0, window_bounds = array<i64: 1, 4, 256>}, {pipeline_mode = #tpu.pipeline_mode<synchronous>, transform_indices = @transform_1, window_bounds = array<i64: 9, 4, 256>}, {pipeline_mode = #tpu.pipeline_mode<synchronous>, transform_indices = @transform_2, window_bounds = array<i64: 4, 36>}, {pipeline_mode = #tpu.pipeline_mode<synchronous>, transform_indices = @transform_3, window_bounds = array<i64: 4, 1>}, {pipeline_mode = #tpu.pipeline_mode<synchronous>, transform_indices = @transform_4, window_bounds = array<i64: 4, 36>}, {pipeline_mode = #tpu.pipeline_mode<synchronous>, transform_indices = @transform_5, window_bounds = array<i64: 4, 1>}, {transform_indices = @transform_6, window_bounds = array<i64: 1, 4, 256>}]} {
    %c0 = arith.constant 0 : index
    %c0_0 = arith.constant 0 : index
    %c0_1 = arith.constant 0 : index
    %0 = vector.load %arg1[%c0, %c0_0, %c0_1] : memref<1x4x256xf32, #tpu.memory_space<vmem>>, vector<1x4x256xf32>
    %1 = vector.shape_cast %0 : vector<1x4x256xf32> to vector<4x256xf32>
    %cst = arith.constant 0.000000e+00 : f32
    %2 = vector.broadcast %cst : f32 to vector<4x256xf32>
    %c17_i32 = arith.constant 17 : i32
    %3 = tpu.dynamic_rotate %1 by %c17_i32 dim 1 : vector<4x256xf32>, i32 -> vector<4x256xf32>
    %c0_2 = arith.constant 0 : index
    %c0_3 = arith.constant 0 : index
    %c0_4 = arith.constant 0 : index
    %4 = vector.load %arg2[%c0_2, %c0_3, %c0_4] : memref<9x4x256xf32, #tpu.memory_space<vmem>>, vector<1x4x256xf32>
    %5 = vector.shape_cast %4 : vector<1x4x256xf32> to vector<4x256xf32>
    %6 = arith.mulf %3, %5 : vector<4x256xf32>
    %c0_5 = arith.constant 0 : index
    %c0_6 = arith.constant 0 : index
    %7 = vector.load %arg3[%c0_5, %c0_6] : memref<4x36xf32, #tpu.memory_space<vmem>>, vector<4x1xf32>
    %8 = vector.extract_strided_slice %6 {offsets = [0, 0], sizes = [1, 256], strides = [1, 1]} : vector<4x256xf32> to vector<1x256xf32>
    %9 = vector.broadcast %7 : vector<4x1xf32> to vector<4x256xf32>
    %10 = vector.broadcast %8 : vector<1x256xf32> to vector<4x256xf32>
    %11 = arith.mulf %9, %10 : vector<4x256xf32>
    %12 = arith.addf %2, %11 : vector<4x256xf32>
    %c0_7 = arith.constant 0 : index
    %c1 = arith.constant 1 : index
    %13 = vector.load %arg3[%c0_7, %c1] : memref<4x36xf32, #tpu.memory_space<vmem>>, vector<4x1xf32>
    %14 = vector.extract_strided_slice %6 {offsets = [1, 0], sizes = [1, 256], strides = [1, 1]} : vector<4x256xf32> to vector<1x256xf32>
    %15 = vector.broadcast %13 : vector<4x1xf32> to vector<4x256xf32>
    %16 = vector.broadcast %14 : vector<1x256xf32> to vector<4x256xf32>
    %17 = arith.mulf %15, %16 : vector<4x256xf32>
    %18 = arith.addf %12, %17 : vector<4x256xf32>
    %c0_8 = arith.constant 0 : index
    %c2 = arith.constant 2 : index
    %19 = vector.load %arg3[%c0_8, %c2] : memref<4x36xf32, #tpu.memory_space<vmem>>, vector<4x1xf32>
    %20 = vector.extract_strided_slice %6 {offsets = [2, 0], sizes = [1, 256], strides = [1, 1]} : vector<4x256xf32> to vector<1x256xf32>
    %21 = vector.broadcast %19 : vector<4x1xf32> to vector<4x256xf32>
    %22 = vector.broadcast %20 : vector<1x256xf32> to vector<4x256xf32>
    %23 = arith.mulf %21, %22 : vector<4x256xf32>
    %24 = arith.addf %18, %23 : vector<4x256xf32>
    %c0_9 = arith.constant 0 : index
    %c3 = arith.constant 3 : index
    %25 = vector.load %arg3[%c0_9, %c3] : memref<4x36xf32, #tpu.memory_space<vmem>>, vector<4x1xf32>
    %26 = vector.extract_strided_slice %6 {offsets = [3, 0], sizes = [1, 256], strides = [1, 1]} : vector<4x256xf32> to vector<1x256xf32>
    %27 = vector.broadcast %25 : vector<4x1xf32> to vector<4x256xf32>
    %28 = vector.broadcast %26 : vector<1x256xf32> to vector<4x256xf32>
    %29 = arith.mulf %27, %28 : vector<4x256xf32>
    %30 = arith.addf %24, %29 : vector<4x256xf32>
    %c16_i32 = arith.constant 16 : i32
    %31 = tpu.dynamic_rotate %1 by %c16_i32 dim 1 : vector<4x256xf32>, i32 -> vector<4x256xf32>
    %c1_10 = arith.constant 1 : index
    %c0_11 = arith.constant 0 : index
    %c0_12 = arith.constant 0 : index
    %32 = vector.load %arg2[%c1_10, %c0_11, %c0_12] : memref<9x4x256xf32, #tpu.memory_space<vmem>>, vector<1x4x256xf32>
    %33 = vector.shape_cast %32 : vector<1x4x256xf32> to vector<4x256xf32>
    %34 = arith.mulf %31, %33 : vector<4x256xf32>
    %c0_13 = arith.constant 0 : index
    %c4 = arith.constant 4 : index
    %35 = vector.load %arg3[%c0_13, %c4] : memref<4x36xf32, #tpu.memory_space<vmem>>, vector<4x1xf32>
    %36 = vector.extract_strided_slice %34 {offsets = [0, 0], sizes = [1, 256], strides = [1, 1]} : vector<4x256xf32> to vector<1x256xf32>
    %37 = vector.broadcast %35 : vector<4x1xf32> to vector<4x256xf32>
    %38 = vector.broadcast %36 : vector<1x256xf32> to vector<4x256xf32>
    %39 = arith.mulf %37, %38 : vector<4x256xf32>
    %40 = arith.addf %30, %39 : vector<4x256xf32>
    %c0_14 = arith.constant 0 : index
    %c5 = arith.constant 5 : index
    %41 = vector.load %arg3[%c0_14, %c5] : memref<4x36xf32, #tpu.memory_space<vmem>>, vector<4x1xf32>
    %42 = vector.extract_strided_slice %34 {offsets = [1, 0], sizes = [1, 256], strides = [1, 1]} : vector<4x256xf32> to vector<1x256xf32>
    %43 = vector.broadcast %41 : vector<4x1xf32> to vector<4x256xf32>
    %44 = vector.broadcast %42 : vector<1x256xf32> to vector<4x256xf32>
    %45 = arith.mulf %43, %44 : vector<4x256xf32>
    %46 = arith.addf %40, %45 : vector<4x256xf32>
    %c0_15 = arith.constant 0 : index
    %c6 = arith.constant 6 : index
    %47 = vector.load %arg3[%c0_15, %c6] : memref<4x36xf32, #tpu.memory_space<vmem>>, vector<4x1xf32>
    %48 = vector.extract_strided_slice %34 {offsets = [2, 0], sizes = [1, 256], strides = [1, 1]} : vector<4x256xf32> to vector<1x256xf32>
    %49 = vector.broadcast %47 : vector<4x1xf32> to vector<4x256xf32>
    %50 = vector.broadcast %48 : vector<1x256xf32> to vector<4x256xf32>
    %51 = arith.mulf %49, %50 : vector<4x256xf32>
    %52 = arith.addf %46, %51 : vector<4x256xf32>
    %c0_16 = arith.constant 0 : index
    %c7 = arith.constant 7 : index
    %53 = vector.load %arg3[%c0_16, %c7] : memref<4x36xf32, #tpu.memory_space<vmem>>, vector<4x1xf32>
    %54 = vector.extract_strided_slice %34 {offsets = [3, 0], sizes = [1, 256], strides = [1, 1]} : vector<4x256xf32> to vector<1x256xf32>
    %55 = vector.broadcast %53 : vector<4x1xf32> to vector<4x256xf32>
    %56 = vector.broadcast %54 : vector<1x256xf32> to vector<4x256xf32>
    %57 = arith.mulf %55, %56 : vector<4x256xf32>
    %58 = arith.addf %52, %57 : vector<4x256xf32>
    %c15_i32 = arith.constant 15 : i32
    %59 = tpu.dynamic_rotate %1 by %c15_i32 dim 1 : vector<4x256xf32>, i32 -> vector<4x256xf32>
    %c2_17 = arith.constant 2 : index
    %c0_18 = arith.constant 0 : index
    %c0_19 = arith.constant 0 : index
    %60 = vector.load %arg2[%c2_17, %c0_18, %c0_19] : memref<9x4x256xf32, #tpu.memory_space<vmem>>, vector<1x4x256xf32>
    %61 = vector.shape_cast %60 : vector<1x4x256xf32> to vector<4x256xf32>
    %62 = arith.mulf %59, %61 : vector<4x256xf32>
    %c0_20 = arith.constant 0 : index
    %c8 = arith.constant 8 : index
    %63 = vector.load %arg3[%c0_20, %c8] : memref<4x36xf32, #tpu.memory_space<vmem>>, vector<4x1xf32>
    %64 = vector.extract_strided_slice %62 {offsets = [0, 0], sizes = [1, 256], strides = [1, 1]} : vector<4x256xf32> to vector<1x256xf32>
    %65 = vector.broadcast %63 : vector<4x1xf32> to vector<4x256xf32>
    %66 = vector.broadcast %64 : vector<1x256xf32> to vector<4x256xf32>
    %67 = arith.mulf %65, %66 : vector<4x256xf32>
    %68 = arith.addf %58, %67 : vector<4x256xf32>
    %c0_21 = arith.constant 0 : index
    %c9 = arith.constant 9 : index
    %69 = vector.load %arg3[%c0_21, %c9] : memref<4x36xf32, #tpu.memory_space<vmem>>, vector<4x1xf32>
    %70 = vector.extract_strided_slice %62 {offsets = [1, 0], sizes = [1, 256], strides = [1, 1]} : vector<4x256xf32> to vector<1x256xf32>
    %71 = vector.broadcast %69 : vector<4x1xf32> to vector<4x256xf32>
    %72 = vector.broadcast %70 : vector<1x256xf32> to vector<4x256xf32>
    %73 = arith.mulf %71, %72 : vector<4x256xf32>
    %74 = arith.addf %68, %73 : vector<4x256xf32>
    %c0_22 = arith.constant 0 : index
    %c10 = arith.constant 10 : index
    %75 = vector.load %arg3[%c0_22, %c10] : memref<4x36xf32, #tpu.memory_space<vmem>>, vector<4x1xf32>
    %76 = vector.extract_strided_slice %62 {offsets = [2, 0], sizes = [1, 256], strides = [1, 1]} : vector<4x256xf32> to vector<1x256xf32>
    %77 = vector.broadcast %75 : vector<4x1xf32> to vector<4x256xf32>
    %78 = vector.broadcast %76 : vector<1x256xf32> to vector<4x256xf32>
    %79 = arith.mulf %77, %78 : vector<4x256xf32>
    %80 = arith.addf %74, %79 : vector<4x256xf32>
    %c0_23 = arith.constant 0 : index
    %c11 = arith.constant 11 : index
    %81 = vector.load %arg3[%c0_23, %c11] : memref<4x36xf32, #tpu.memory_space<vmem>>, vector<4x1xf32>
    %82 = vector.extract_strided_slice %62 {offsets = [3, 0], sizes = [1, 256], strides = [1, 1]} : vector<4x256xf32> to vector<1x256xf32>
    %83 = vector.broadcast %81 : vector<4x1xf32> to vector<4x256xf32>
    %84 = vector.broadcast %82 : vector<1x256xf32> to vector<4x256xf32>
    %85 = arith.mulf %83, %84 : vector<4x256xf32>
    %86 = arith.addf %80, %85 : vector<4x256xf32>
    %c1_i32 = arith.constant 1 : i32
    %87 = tpu.dynamic_rotate %1 by %c1_i32 dim 1 : vector<4x256xf32>, i32 -> vector<4x256xf32>
    %c3_24 = arith.constant 3 : index
    %c0_25 = arith.constant 0 : index
    %c0_26 = arith.constant 0 : index
    %88 = vector.load %arg2[%c3_24, %c0_25, %c0_26] : memref<9x4x256xf32, #tpu.memory_space<vmem>>, vector<1x4x256xf32>
    %89 = vector.shape_cast %88 : vector<1x4x256xf32> to vector<4x256xf32>
    %90 = arith.mulf %87, %89 : vector<4x256xf32>
    %c0_27 = arith.constant 0 : index
    %c12 = arith.constant 12 : index
    %91 = vector.load %arg3[%c0_27, %c12] : memref<4x36xf32, #tpu.memory_space<vmem>>, vector<4x1xf32>
    %92 = vector.extract_strided_slice %90 {offsets = [0, 0], sizes = [1, 256], strides = [1, 1]} : vector<4x256xf32> to vector<1x256xf32>
    %93 = vector.broadcast %91 : vector<4x1xf32> to vector<4x256xf32>
    %94 = vector.broadcast %92 : vector<1x256xf32> to vector<4x256xf32>
    %95 = arith.mulf %93, %94 : vector<4x256xf32>
    %96 = arith.addf %86, %95 : vector<4x256xf32>
    %c0_28 = arith.constant 0 : index
    %c13 = arith.constant 13 : index
    %97 = vector.load %arg3[%c0_28, %c13] : memref<4x36xf32, #tpu.memory_space<vmem>>, vector<4x1xf32>
    %98 = vector.extract_strided_slice %90 {offsets = [1, 0], sizes = [1, 256], strides = [1, 1]} : vector<4x256xf32> to vector<1x256xf32>
    %99 = vector.broadcast %97 : vector<4x1xf32> to vector<4x256xf32>
    %100 = vector.broadcast %98 : vector<1x256xf32> to vector<4x256xf32>
    %101 = arith.mulf %99, %100 : vector<4x256xf32>
    %102 = arith.addf %96, %101 : vector<4x256xf32>
    %c0_29 = arith.constant 0 : index
    %c14 = arith.constant 14 : index
    %103 = vector.load %arg3[%c0_29, %c14] : memref<4x36xf32, #tpu.memory_space<vmem>>, vector<4x1xf32>
    %104 = vector.extract_strided_slice %90 {offsets = [2, 0], sizes = [1, 256], strides = [1, 1]} : vector<4x256xf32> to vector<1x256xf32>
    %105 = vector.broadcast %103 : vector<4x1xf32> to vector<4x256xf32>
    %106 = vector.broadcast %104 : vector<1x256xf32> to vector<4x256xf32>
    %107 = arith.mulf %105, %106 : vector<4x256xf32>
    %108 = arith.addf %102, %107 : vector<4x256xf32>
    %c0_30 = arith.constant 0 : index
    %c15 = arith.constant 15 : index
    %109 = vector.load %arg3[%c0_30, %c15] : memref<4x36xf32, #tpu.memory_space<vmem>>, vector<4x1xf32>
    %110 = vector.extract_strided_slice %90 {offsets = [3, 0], sizes = [1, 256], strides = [1, 1]} : vector<4x256xf32> to vector<1x256xf32>
    %111 = vector.broadcast %109 : vector<4x1xf32> to vector<4x256xf32>
    %112 = vector.broadcast %110 : vector<1x256xf32> to vector<4x256xf32>
    %113 = arith.mulf %111, %112 : vector<4x256xf32>
    %114 = arith.addf %108, %113 : vector<4x256xf32>
    %c0_31 = arith.constant 0 : index
    %c16 = arith.constant 16 : index
    %115 = vector.load %arg3[%c0_31, %c16] : memref<4x36xf32, #tpu.memory_space<vmem>>, vector<4x1xf32>
    %116 = vector.extract_strided_slice %1 {offsets = [0, 0], sizes = [1, 256], strides = [1, 1]} : vector<4x256xf32> to vector<1x256xf32>
    %117 = vector.broadcast %115 : vector<4x1xf32> to vector<4x256xf32>
    %118 = vector.broadcast %116 : vector<1x256xf32> to vector<4x256xf32>
    %119 = arith.mulf %117, %118 : vector<4x256xf32>
    %120 = arith.addf %114, %119 : vector<4x256xf32>
    %c0_32 = arith.constant 0 : index
    %c17 = arith.constant 17 : index
    %121 = vector.load %arg3[%c0_32, %c17] : memref<4x36xf32, #tpu.memory_space<vmem>>, vector<4x1xf32>
    %122 = vector.extract_strided_slice %1 {offsets = [1, 0], sizes = [1, 256], strides = [1, 1]} : vector<4x256xf32> to vector<1x256xf32>
    %123 = vector.broadcast %121 : vector<4x1xf32> to vector<4x256xf32>
    %124 = vector.broadcast %122 : vector<1x256xf32> to vector<4x256xf32>
    %125 = arith.mulf %123, %124 : vector<4x256xf32>
    %126 = arith.addf %120, %125 : vector<4x256xf32>
    %c0_33 = arith.constant 0 : index
    %c18 = arith.constant 18 : index
    %127 = vector.load %arg3[%c0_33, %c18] : memref<4x36xf32, #tpu.memory_space<vmem>>, vector<4x1xf32>
    %128 = vector.extract_strided_slice %1 {offsets = [2, 0], sizes = [1, 256], strides = [1, 1]} : vector<4x256xf32> to vector<1x256xf32>
    %129 = vector.broadcast %127 : vector<4x1xf32> to vector<4x256xf32>
    %130 = vector.broadcast %128 : vector<1x256xf32> to vector<4x256xf32>
    %131 = arith.mulf %129, %130 : vector<4x256xf32>
    %132 = arith.addf %126, %131 : vector<4x256xf32>
    %c0_34 = arith.constant 0 : index
    %c19 = arith.constant 19 : index
    %133 = vector.load %arg3[%c0_34, %c19] : memref<4x36xf32, #tpu.memory_space<vmem>>, vector<4x1xf32>
    %134 = vector.extract_strided_slice %1 {offsets = [3, 0], sizes = [1, 256], strides = [1, 1]} : vector<4x256xf32> to vector<1x256xf32>
    %135 = vector.broadcast %133 : vector<4x1xf32> to vector<4x256xf32>
    %136 = vector.broadcast %134 : vector<1x256xf32> to vector<4x256xf32>
    %137 = arith.mulf %135, %136 : vector<4x256xf32>
    %138 = arith.addf %132, %137 : vector<4x256xf32>
    %c255_i32 = arith.constant 255 : i32
    %139 = tpu.dynamic_rotate %1 by %c255_i32 dim 1 : vector<4x256xf32>, i32 -> vector<4x256xf32>
    %c5_35 = arith.constant 5 : index
    %c0_36 = arith.constant 0 : index
    %c0_37 = arith.constant 0 : index
    %140 = vector.load %arg2[%c5_35, %c0_36, %c0_37] : memref<9x4x256xf32, #tpu.memory_space<vmem>>, vector<1x4x256xf32>
    %141 = vector.shape_cast %140 : vector<1x4x256xf32> to vector<4x256xf32>
    %142 = arith.mulf %139, %141 : vector<4x256xf32>
    %c0_38 = arith.constant 0 : index
    %c20 = arith.constant 20 : index
    %143 = vector.load %arg3[%c0_38, %c20] : memref<4x36xf32, #tpu.memory_space<vmem>>, vector<4x1xf32>
    %144 = vector.extract_strided_slice %142 {offsets = [0, 0], sizes = [1, 256], strides = [1, 1]} : vector<4x256xf32> to vector<1x256xf32>
    %145 = vector.broadcast %143 : vector<4x1xf32> to vector<4x256xf32>
    %146 = vector.broadcast %144 : vector<1x256xf32> to vector<4x256xf32>
    %147 = arith.mulf %145, %146 : vector<4x256xf32>
    %148 = arith.addf %138, %147 : vector<4x256xf32>
    %c0_39 = arith.constant 0 : index
    %c21 = arith.constant 21 : index
    %149 = vector.load %arg3[%c0_39, %c21] : memref<4x36xf32, #tpu.memory_space<vmem>>, vector<4x1xf32>
    %150 = vector.extract_strided_slice %142 {offsets = [1, 0], sizes = [1, 256], strides = [1, 1]} : vector<4x256xf32> to vector<1x256xf32>
    %151 = vector.broadcast %149 : vector<4x1xf32> to vector<4x256xf32>
    %152 = vector.broadcast %150 : vector<1x256xf32> to vector<4x256xf32>
    %153 = arith.mulf %151, %152 : vector<4x256xf32>
    %154 = arith.addf %148, %153 : vector<4x256xf32>
    %c0_40 = arith.constant 0 : index
    %c22 = arith.constant 22 : index
    %155 = vector.load %arg3[%c0_40, %c22] : memref<4x36xf32, #tpu.memory_space<vmem>>, vector<4x1xf32>
    %156 = vector.extract_strided_slice %142 {offsets = [2, 0], sizes = [1, 256], strides = [1, 1]} : vector<4x256xf32> to vector<1x256xf32>
    %157 = vector.broadcast %155 : vector<4x1xf32> to vector<4x256xf32>
    %158 = vector.broadcast %156 : vector<1x256xf32> to vector<4x256xf32>
    %159 = arith.mulf %157, %158 : vector<4x256xf32>
    %160 = arith.addf %154, %159 : vector<4x256xf32>
    %c0_41 = arith.constant 0 : index
    %c23 = arith.constant 23 : index
    %161 = vector.load %arg3[%c0_41, %c23] : memref<4x36xf32, #tpu.memory_space<vmem>>, vector<4x1xf32>
    %162 = vector.extract_strided_slice %142 {offsets = [3, 0], sizes = [1, 256], strides = [1, 1]} : vector<4x256xf32> to vector<1x256xf32>
    %163 = vector.broadcast %161 : vector<4x1xf32> to vector<4x256xf32>
    %164 = vector.broadcast %162 : vector<1x256xf32> to vector<4x256xf32>
    %165 = arith.mulf %163, %164 : vector<4x256xf32>
    %166 = arith.addf %160, %165 : vector<4x256xf32>
    %c241_i32 = arith.constant 241 : i32
    %167 = tpu.dynamic_rotate %1 by %c241_i32 dim 1 : vector<4x256xf32>, i32 -> vector<4x256xf32>
    %c6_42 = arith.constant 6 : index
    %c0_43 = arith.constant 0 : index
    %c0_44 = arith.constant 0 : index
    %168 = vector.load %arg2[%c6_42, %c0_43, %c0_44] : memref<9x4x256xf32, #tpu.memory_space<vmem>>, vector<1x4x256xf32>
    %169 = vector.shape_cast %168 : vector<1x4x256xf32> to vector<4x256xf32>
    %170 = arith.mulf %167, %169 : vector<4x256xf32>
    %c0_45 = arith.constant 0 : index
    %c24 = arith.constant 24 : index
    %171 = vector.load %arg3[%c0_45, %c24] : memref<4x36xf32, #tpu.memory_space<vmem>>, vector<4x1xf32>
    %172 = vector.extract_strided_slice %170 {offsets = [0, 0], sizes = [1, 256], strides = [1, 1]} : vector<4x256xf32> to vector<1x256xf32>
    %173 = vector.broadcast %171 : vector<4x1xf32> to vector<4x256xf32>
    %174 = vector.broadcast %172 : vector<1x256xf32> to vector<4x256xf32>
    %175 = arith.mulf %173, %174 : vector<4x256xf32>
    %176 = arith.addf %166, %175 : vector<4x256xf32>
    %c0_46 = arith.constant 0 : index
    %c25 = arith.constant 25 : index
    %177 = vector.load %arg3[%c0_46, %c25] : memref<4x36xf32, #tpu.memory_space<vmem>>, vector<4x1xf32>
    %178 = vector.extract_strided_slice %170 {offsets = [1, 0], sizes = [1, 256], strides = [1, 1]} : vector<4x256xf32> to vector<1x256xf32>
    %179 = vector.broadcast %177 : vector<4x1xf32> to vector<4x256xf32>
    %180 = vector.broadcast %178 : vector<1x256xf32> to vector<4x256xf32>
    %181 = arith.mulf %179, %180 : vector<4x256xf32>
    %182 = arith.addf %176, %181 : vector<4x256xf32>
    %c0_47 = arith.constant 0 : index
    %c26 = arith.constant 26 : index
    %183 = vector.load %arg3[%c0_47, %c26] : memref<4x36xf32, #tpu.memory_space<vmem>>, vector<4x1xf32>
    %184 = vector.extract_strided_slice %170 {offsets = [2, 0], sizes = [1, 256], strides = [1, 1]} : vector<4x256xf32> to vector<1x256xf32>
    %185 = vector.broadcast %183 : vector<4x1xf32> to vector<4x256xf32>
    %186 = vector.broadcast %184 : vector<1x256xf32> to vector<4x256xf32>
    %187 = arith.mulf %185, %186 : vector<4x256xf32>
    %188 = arith.addf %182, %187 : vector<4x256xf32>
    %c0_48 = arith.constant 0 : index
    %c27 = arith.constant 27 : index
    %189 = vector.load %arg3[%c0_48, %c27] : memref<4x36xf32, #tpu.memory_space<vmem>>, vector<4x1xf32>
    %190 = vector.extract_strided_slice %170 {offsets = [3, 0], sizes = [1, 256], strides = [1, 1]} : vector<4x256xf32> to vector<1x256xf32>
    %191 = vector.broadcast %189 : vector<4x1xf32> to vector<4x256xf32>
    %192 = vector.broadcast %190 : vector<1x256xf32> to vector<4x256xf32>
    %193 = arith.mulf %191, %192 : vector<4x256xf32>
    %194 = arith.addf %188, %193 : vector<4x256xf32>
    %c240_i32 = arith.constant 240 : i32
    %195 = tpu.dynamic_rotate %1 by %c240_i32 dim 1 : vector<4x256xf32>, i32 -> vector<4x256xf32>
    %c7_49 = arith.constant 7 : index
    %c0_50 = arith.constant 0 : index
    %c0_51 = arith.constant 0 : index
    %196 = vector.load %arg2[%c7_49, %c0_50, %c0_51] : memref<9x4x256xf32, #tpu.memory_space<vmem>>, vector<1x4x256xf32>
    %197 = vector.shape_cast %196 : vector<1x4x256xf32> to vector<4x256xf32>
    %198 = arith.mulf %195, %197 : vector<4x256xf32>
    %c0_52 = arith.constant 0 : index
    %c28 = arith.constant 28 : index
    %199 = vector.load %arg3[%c0_52, %c28] : memref<4x36xf32, #tpu.memory_space<vmem>>, vector<4x1xf32>
    %200 = vector.extract_strided_slice %198 {offsets = [0, 0], sizes = [1, 256], strides = [1, 1]} : vector<4x256xf32> to vector<1x256xf32>
    %201 = vector.broadcast %199 : vector<4x1xf32> to vector<4x256xf32>
    %202 = vector.broadcast %200 : vector<1x256xf32> to vector<4x256xf32>
    %203 = arith.mulf %201, %202 : vector<4x256xf32>
    %204 = arith.addf %194, %203 : vector<4x256xf32>
    %c0_53 = arith.constant 0 : index
    %c29 = arith.constant 29 : index
    %205 = vector.load %arg3[%c0_53, %c29] : memref<4x36xf32, #tpu.memory_space<vmem>>, vector<4x1xf32>
    %206 = vector.extract_strided_slice %198 {offsets = [1, 0], sizes = [1, 256], strides = [1, 1]} : vector<4x256xf32> to vector<1x256xf32>
    %207 = vector.broadcast %205 : vector<4x1xf32> to vector<4x256xf32>
    %208 = vector.broadcast %206 : vector<1x256xf32> to vector<4x256xf32>
    %209 = arith.mulf %207, %208 : vector<4x256xf32>
    %210 = arith.addf %204, %209 : vector<4x256xf32>
    %c0_54 = arith.constant 0 : index
    %c30 = arith.constant 30 : index
    %211 = vector.load %arg3[%c0_54, %c30] : memref<4x36xf32, #tpu.memory_space<vmem>>, vector<4x1xf32>
    %212 = vector.extract_strided_slice %198 {offsets = [2, 0], sizes = [1, 256], strides = [1, 1]} : vector<4x256xf32> to vector<1x256xf32>
    %213 = vector.broadcast %211 : vector<4x1xf32> to vector<4x256xf32>
    %214 = vector.broadcast %212 : vector<1x256xf32> to vector<4x256xf32>
    %215 = arith.mulf %213, %214 : vector<4x256xf32>
    %216 = arith.addf %210, %215 : vector<4x256xf32>
    %c0_55 = arith.constant 0 : index
    %c31 = arith.constant 31 : index
    %217 = vector.load %arg3[%c0_55, %c31] : memref<4x36xf32, #tpu.memory_space<vmem>>, vector<4x1xf32>
    %218 = vector.extract_strided_slice %198 {offsets = [3, 0], sizes = [1, 256], strides = [1, 1]} : vector<4x256xf32> to vector<1x256xf32>
    %219 = vector.broadcast %217 : vector<4x1xf32> to vector<4x256xf32>
    %220 = vector.broadcast %218 : vector<1x256xf32> to vector<4x256xf32>
    %221 = arith.mulf %219, %220 : vector<4x256xf32>
    %222 = arith.addf %216, %221 : vector<4x256xf32>
    %c239_i32 = arith.constant 239 : i32
    %223 = tpu.dynamic_rotate %1 by %c239_i32 dim 1 : vector<4x256xf32>, i32 -> vector<4x256xf32>
    %c8_56 = arith.constant 8 : index
    %c0_57 = arith.constant 0 : index
    %c0_58 = arith.constant 0 : index
    %224 = vector.load %arg2[%c8_56, %c0_57, %c0_58] : memref<9x4x256xf32, #tpu.memory_space<vmem>>, vector<1x4x256xf32>
    %225 = vector.shape_cast %224 : vector<1x4x256xf32> to vector<4x256xf32>
    %226 = arith.mulf %223, %225 : vector<4x256xf32>
    %c0_59 = arith.constant 0 : index
    %c32 = arith.constant 32 : index
    %227 = vector.load %arg3[%c0_59, %c32] : memref<4x36xf32, #tpu.memory_space<vmem>>, vector<4x1xf32>
    %228 = vector.extract_strided_slice %226 {offsets = [0, 0], sizes = [1, 256], strides = [1, 1]} : vector<4x256xf32> to vector<1x256xf32>
    %229 = vector.broadcast %227 : vector<4x1xf32> to vector<4x256xf32>
    %230 = vector.broadcast %228 : vector<1x256xf32> to vector<4x256xf32>
    %231 = arith.mulf %229, %230 : vector<4x256xf32>
    %232 = arith.addf %222, %231 : vector<4x256xf32>
    %c0_60 = arith.constant 0 : index
    %c33 = arith.constant 33 : index
    %233 = vector.load %arg3[%c0_60, %c33] : memref<4x36xf32, #tpu.memory_space<vmem>>, vector<4x1xf32>
    %234 = vector.extract_strided_slice %226 {offsets = [1, 0], sizes = [1, 256], strides = [1, 1]} : vector<4x256xf32> to vector<1x256xf32>
    %235 = vector.broadcast %233 : vector<4x1xf32> to vector<4x256xf32>
    %236 = vector.broadcast %234 : vector<1x256xf32> to vector<4x256xf32>
    %237 = arith.mulf %235, %236 : vector<4x256xf32>
    %238 = arith.addf %232, %237 : vector<4x256xf32>
    %c0_61 = arith.constant 0 : index
    %c34 = arith.constant 34 : index
    %239 = vector.load %arg3[%c0_61, %c34] : memref<4x36xf32, #tpu.memory_space<vmem>>, vector<4x1xf32>
    %240 = vector.extract_strided_slice %226 {offsets = [2, 0], sizes = [1, 256], strides = [1, 1]} : vector<4x256xf32> to vector<1x256xf32>
    %241 = vector.broadcast %239 : vector<4x1xf32> to vector<4x256xf32>
    %242 = vector.broadcast %240 : vector<1x256xf32> to vector<4x256xf32>
    %243 = arith.mulf %241, %242 : vector<4x256xf32>
    %244 = arith.addf %238, %243 : vector<4x256xf32>
    %c0_62 = arith.constant 0 : index
    %c35 = arith.constant 35 : index
    %245 = vector.load %arg3[%c0_62, %c35] : memref<4x36xf32, #tpu.memory_space<vmem>>, vector<4x1xf32>
    %246 = vector.extract_strided_slice %226 {offsets = [3, 0], sizes = [1, 256], strides = [1, 1]} : vector<4x256xf32> to vector<1x256xf32>
    %247 = vector.broadcast %245 : vector<4x1xf32> to vector<4x256xf32>
    %248 = vector.broadcast %246 : vector<1x256xf32> to vector<4x256xf32>
    %249 = arith.mulf %247, %248 : vector<4x256xf32>
    %250 = arith.addf %244, %249 : vector<4x256xf32>
    %c0_63 = arith.constant 0 : index
    %c0_64 = arith.constant 0 : index
    %251 = vector.load %arg4[%c0_63, %c0_64] : memref<4x1xf32, #tpu.memory_space<vmem>>, vector<4x1xf32>
    %252 = vector.broadcast %251 : vector<4x1xf32> to vector<4x256xf32>
    %253 = arith.addf %250, %252 : vector<4x256xf32>
    %cst_65 = arith.constant 0.000000e+00 : f32
    %254 = vector.broadcast %cst_65 : f32 to vector<4x256xf32>
    %255 = arith.maximumf %253, %254 : vector<4x256xf32>
    %cst_66 = arith.constant 0.000000e+00 : f32
    %256 = vector.broadcast %cst_66 : f32 to vector<4x256xf32>
    %c17_i32_67 = arith.constant 17 : i32
    %257 = tpu.dynamic_rotate %255 by %c17_i32_67 dim 1 : vector<4x256xf32>, i32 -> vector<4x256xf32>
    %c0_68 = arith.constant 0 : index
    %c0_69 = arith.constant 0 : index
    %c0_70 = arith.constant 0 : index
    %258 = vector.load %arg2[%c0_68, %c0_69, %c0_70] : memref<9x4x256xf32, #tpu.memory_space<vmem>>, vector<1x4x256xf32>
    %259 = vector.shape_cast %258 : vector<1x4x256xf32> to vector<4x256xf32>
    %260 = arith.mulf %257, %259 : vector<4x256xf32>
    %c0_71 = arith.constant 0 : index
    %c0_72 = arith.constant 0 : index
    %261 = vector.load %arg5[%c0_71, %c0_72] : memref<4x36xf32, #tpu.memory_space<vmem>>, vector<4x1xf32>
    %262 = vector.extract_strided_slice %260 {offsets = [0, 0], sizes = [1, 256], strides = [1, 1]} : vector<4x256xf32> to vector<1x256xf32>
    %263 = vector.broadcast %261 : vector<4x1xf32> to vector<4x256xf32>
    %264 = vector.broadcast %262 : vector<1x256xf32> to vector<4x256xf32>
    %265 = arith.mulf %263, %264 : vector<4x256xf32>
    %266 = arith.addf %256, %265 : vector<4x256xf32>
    %c0_73 = arith.constant 0 : index
    %c1_74 = arith.constant 1 : index
    %267 = vector.load %arg5[%c0_73, %c1_74] : memref<4x36xf32, #tpu.memory_space<vmem>>, vector<4x1xf32>
    %268 = vector.extract_strided_slice %260 {offsets = [1, 0], sizes = [1, 256], strides = [1, 1]} : vector<4x256xf32> to vector<1x256xf32>
    %269 = vector.broadcast %267 : vector<4x1xf32> to vector<4x256xf32>
    %270 = vector.broadcast %268 : vector<1x256xf32> to vector<4x256xf32>
    %271 = arith.mulf %269, %270 : vector<4x256xf32>
    %272 = arith.addf %266, %271 : vector<4x256xf32>
    %c0_75 = arith.constant 0 : index
    %c2_76 = arith.constant 2 : index
    %273 = vector.load %arg5[%c0_75, %c2_76] : memref<4x36xf32, #tpu.memory_space<vmem>>, vector<4x1xf32>
    %274 = vector.extract_strided_slice %260 {offsets = [2, 0], sizes = [1, 256], strides = [1, 1]} : vector<4x256xf32> to vector<1x256xf32>
    %275 = vector.broadcast %273 : vector<4x1xf32> to vector<4x256xf32>
    %276 = vector.broadcast %274 : vector<1x256xf32> to vector<4x256xf32>
    %277 = arith.mulf %275, %276 : vector<4x256xf32>
    %278 = arith.addf %272, %277 : vector<4x256xf32>
    %c0_77 = arith.constant 0 : index
    %c3_78 = arith.constant 3 : index
    %279 = vector.load %arg5[%c0_77, %c3_78] : memref<4x36xf32, #tpu.memory_space<vmem>>, vector<4x1xf32>
    %280 = vector.extract_strided_slice %260 {offsets = [3, 0], sizes = [1, 256], strides = [1, 1]} : vector<4x256xf32> to vector<1x256xf32>
    %281 = vector.broadcast %279 : vector<4x1xf32> to vector<4x256xf32>
    %282 = vector.broadcast %280 : vector<1x256xf32> to vector<4x256xf32>
    %283 = arith.mulf %281, %282 : vector<4x256xf32>
    %284 = arith.addf %278, %283 : vector<4x256xf32>
    %c16_i32_79 = arith.constant 16 : i32
    %285 = tpu.dynamic_rotate %255 by %c16_i32_79 dim 1 : vector<4x256xf32>, i32 -> vector<4x256xf32>
    %c1_80 = arith.constant 1 : index
    %c0_81 = arith.constant 0 : index
    %c0_82 = arith.constant 0 : index
    %286 = vector.load %arg2[%c1_80, %c0_81, %c0_82] : memref<9x4x256xf32, #tpu.memory_space<vmem>>, vector<1x4x256xf32>
    %287 = vector.shape_cast %286 : vector<1x4x256xf32> to vector<4x256xf32>
    %288 = arith.mulf %285, %287 : vector<4x256xf32>
    %c0_83 = arith.constant 0 : index
    %c4_84 = arith.constant 4 : index
    %289 = vector.load %arg5[%c0_83, %c4_84] : memref<4x36xf32, #tpu.memory_space<vmem>>, vector<4x1xf32>
    %290 = vector.extract_strided_slice %288 {offsets = [0, 0], sizes = [1, 256], strides = [1, 1]} : vector<4x256xf32> to vector<1x256xf32>
    %291 = vector.broadcast %289 : vector<4x1xf32> to vector<4x256xf32>
    %292 = vector.broadcast %290 : vector<1x256xf32> to vector<4x256xf32>
    %293 = arith.mulf %291, %292 : vector<4x256xf32>
    %294 = arith.addf %284, %293 : vector<4x256xf32>
    %c0_85 = arith.constant 0 : index
    %c5_86 = arith.constant 5 : index
    %295 = vector.load %arg5[%c0_85, %c5_86] : memref<4x36xf32, #tpu.memory_space<vmem>>, vector<4x1xf32>
    %296 = vector.extract_strided_slice %288 {offsets = [1, 0], sizes = [1, 256], strides = [1, 1]} : vector<4x256xf32> to vector<1x256xf32>
    %297 = vector.broadcast %295 : vector<4x1xf32> to vector<4x256xf32>
    %298 = vector.broadcast %296 : vector<1x256xf32> to vector<4x256xf32>
    %299 = arith.mulf %297, %298 : vector<4x256xf32>
    %300 = arith.addf %294, %299 : vector<4x256xf32>
    %c0_87 = arith.constant 0 : index
    %c6_88 = arith.constant 6 : index
    %301 = vector.load %arg5[%c0_87, %c6_88] : memref<4x36xf32, #tpu.memory_space<vmem>>, vector<4x1xf32>
    %302 = vector.extract_strided_slice %288 {offsets = [2, 0], sizes = [1, 256], strides = [1, 1]} : vector<4x256xf32> to vector<1x256xf32>
    %303 = vector.broadcast %301 : vector<4x1xf32> to vector<4x256xf32>
    %304 = vector.broadcast %302 : vector<1x256xf32> to vector<4x256xf32>
    %305 = arith.mulf %303, %304 : vector<4x256xf32>
    %306 = arith.addf %300, %305 : vector<4x256xf32>
    %c0_89 = arith.constant 0 : index
    %c7_90 = arith.constant 7 : index
    %307 = vector.load %arg5[%c0_89, %c7_90] : memref<4x36xf32, #tpu.memory_space<vmem>>, vector<4x1xf32>
    %308 = vector.extract_strided_slice %288 {offsets = [3, 0], sizes = [1, 256], strides = [1, 1]} : vector<4x256xf32> to vector<1x256xf32>
    %309 = vector.broadcast %307 : vector<4x1xf32> to vector<4x256xf32>
    %310 = vector.broadcast %308 : vector<1x256xf32> to vector<4x256xf32>
    %311 = arith.mulf %309, %310 : vector<4x256xf32>
    %312 = arith.addf %306, %311 : vector<4x256xf32>
    %c15_i32_91 = arith.constant 15 : i32
    %313 = tpu.dynamic_rotate %255 by %c15_i32_91 dim 1 : vector<4x256xf32>, i32 -> vector<4x256xf32>
    %c2_92 = arith.constant 2 : index
    %c0_93 = arith.constant 0 : index
    %c0_94 = arith.constant 0 : index
    %314 = vector.load %arg2[%c2_92, %c0_93, %c0_94] : memref<9x4x256xf32, #tpu.memory_space<vmem>>, vector<1x4x256xf32>
    %315 = vector.shape_cast %314 : vector<1x4x256xf32> to vector<4x256xf32>
    %316 = arith.mulf %313, %315 : vector<4x256xf32>
    %c0_95 = arith.constant 0 : index
    %c8_96 = arith.constant 8 : index
    %317 = vector.load %arg5[%c0_95, %c8_96] : memref<4x36xf32, #tpu.memory_space<vmem>>, vector<4x1xf32>
    %318 = vector.extract_strided_slice %316 {offsets = [0, 0], sizes = [1, 256], strides = [1, 1]} : vector<4x256xf32> to vector<1x256xf32>
    %319 = vector.broadcast %317 : vector<4x1xf32> to vector<4x256xf32>
    %320 = vector.broadcast %318 : vector<1x256xf32> to vector<4x256xf32>
    %321 = arith.mulf %319, %320 : vector<4x256xf32>
    %322 = arith.addf %312, %321 : vector<4x256xf32>
    %c0_97 = arith.constant 0 : index
    %c9_98 = arith.constant 9 : index
    %323 = vector.load %arg5[%c0_97, %c9_98] : memref<4x36xf32, #tpu.memory_space<vmem>>, vector<4x1xf32>
    %324 = vector.extract_strided_slice %316 {offsets = [1, 0], sizes = [1, 256], strides = [1, 1]} : vector<4x256xf32> to vector<1x256xf32>
    %325 = vector.broadcast %323 : vector<4x1xf32> to vector<4x256xf32>
    %326 = vector.broadcast %324 : vector<1x256xf32> to vector<4x256xf32>
    %327 = arith.mulf %325, %326 : vector<4x256xf32>
    %328 = arith.addf %322, %327 : vector<4x256xf32>
    %c0_99 = arith.constant 0 : index
    %c10_100 = arith.constant 10 : index
    %329 = vector.load %arg5[%c0_99, %c10_100] : memref<4x36xf32, #tpu.memory_space<vmem>>, vector<4x1xf32>
    %330 = vector.extract_strided_slice %316 {offsets = [2, 0], sizes = [1, 256], strides = [1, 1]} : vector<4x256xf32> to vector<1x256xf32>
    %331 = vector.broadcast %329 : vector<4x1xf32> to vector<4x256xf32>
    %332 = vector.broadcast %330 : vector<1x256xf32> to vector<4x256xf32>
    %333 = arith.mulf %331, %332 : vector<4x256xf32>
    %334 = arith.addf %328, %333 : vector<4x256xf32>
    %c0_101 = arith.constant 0 : index
    %c11_102 = arith.constant 11 : index
    %335 = vector.load %arg5[%c0_101, %c11_102] : memref<4x36xf32, #tpu.memory_space<vmem>>, vector<4x1xf32>
    %336 = vector.extract_strided_slice %316 {offsets = [3, 0], sizes = [1, 256], strides = [1, 1]} : vector<4x256xf32> to vector<1x256xf32>
    %337 = vector.broadcast %335 : vector<4x1xf32> to vector<4x256xf32>
    %338 = vector.broadcast %336 : vector<1x256xf32> to vector<4x256xf32>
    %339 = arith.mulf %337, %338 : vector<4x256xf32>
    %340 = arith.addf %334, %339 : vector<4x256xf32>
    %c1_i32_103 = arith.constant 1 : i32
    %341 = tpu.dynamic_rotate %255 by %c1_i32_103 dim 1 : vector<4x256xf32>, i32 -> vector<4x256xf32>
    %c3_104 = arith.constant 3 : index
    %c0_105 = arith.constant 0 : index
    %c0_106 = arith.constant 0 : index
    %342 = vector.load %arg2[%c3_104, %c0_105, %c0_106] : memref<9x4x256xf32, #tpu.memory_space<vmem>>, vector<1x4x256xf32>
    %343 = vector.shape_cast %342 : vector<1x4x256xf32> to vector<4x256xf32>
    %344 = arith.mulf %341, %343 : vector<4x256xf32>
    %c0_107 = arith.constant 0 : index
    %c12_108 = arith.constant 12 : index
    %345 = vector.load %arg5[%c0_107, %c12_108] : memref<4x36xf32, #tpu.memory_space<vmem>>, vector<4x1xf32>
    %346 = vector.extract_strided_slice %344 {offsets = [0, 0], sizes = [1, 256], strides = [1, 1]} : vector<4x256xf32> to vector<1x256xf32>
    %347 = vector.broadcast %345 : vector<4x1xf32> to vector<4x256xf32>
    %348 = vector.broadcast %346 : vector<1x256xf32> to vector<4x256xf32>
    %349 = arith.mulf %347, %348 : vector<4x256xf32>
    %350 = arith.addf %340, %349 : vector<4x256xf32>
    %c0_109 = arith.constant 0 : index
    %c13_110 = arith.constant 13 : index
    %351 = vector.load %arg5[%c0_109, %c13_110] : memref<4x36xf32, #tpu.memory_space<vmem>>, vector<4x1xf32>
    %352 = vector.extract_strided_slice %344 {offsets = [1, 0], sizes = [1, 256], strides = [1, 1]} : vector<4x256xf32> to vector<1x256xf32>
    %353 = vector.broadcast %351 : vector<4x1xf32> to vector<4x256xf32>
    %354 = vector.broadcast %352 : vector<1x256xf32> to vector<4x256xf32>
    %355 = arith.mulf %353, %354 : vector<4x256xf32>
    %356 = arith.addf %350, %355 : vector<4x256xf32>
    %c0_111 = arith.constant 0 : index
    %c14_112 = arith.constant 14 : index
    %357 = vector.load %arg5[%c0_111, %c14_112] : memref<4x36xf32, #tpu.memory_space<vmem>>, vector<4x1xf32>
    %358 = vector.extract_strided_slice %344 {offsets = [2, 0], sizes = [1, 256], strides = [1, 1]} : vector<4x256xf32> to vector<1x256xf32>
    %359 = vector.broadcast %357 : vector<4x1xf32> to vector<4x256xf32>
    %360 = vector.broadcast %358 : vector<1x256xf32> to vector<4x256xf32>
    %361 = arith.mulf %359, %360 : vector<4x256xf32>
    %362 = arith.addf %356, %361 : vector<4x256xf32>
    %c0_113 = arith.constant 0 : index
    %c15_114 = arith.constant 15 : index
    %363 = vector.load %arg5[%c0_113, %c15_114] : memref<4x36xf32, #tpu.memory_space<vmem>>, vector<4x1xf32>
    %364 = vector.extract_strided_slice %344 {offsets = [3, 0], sizes = [1, 256], strides = [1, 1]} : vector<4x256xf32> to vector<1x256xf32>
    %365 = vector.broadcast %363 : vector<4x1xf32> to vector<4x256xf32>
    %366 = vector.broadcast %364 : vector<1x256xf32> to vector<4x256xf32>
    %367 = arith.mulf %365, %366 : vector<4x256xf32>
    %368 = arith.addf %362, %367 : vector<4x256xf32>
    %c0_115 = arith.constant 0 : index
    %c16_116 = arith.constant 16 : index
    %369 = vector.load %arg5[%c0_115, %c16_116] : memref<4x36xf32, #tpu.memory_space<vmem>>, vector<4x1xf32>
    %370 = vector.extract_strided_slice %255 {offsets = [0, 0], sizes = [1, 256], strides = [1, 1]} : vector<4x256xf32> to vector<1x256xf32>
    %371 = vector.broadcast %369 : vector<4x1xf32> to vector<4x256xf32>
    %372 = vector.broadcast %370 : vector<1x256xf32> to vector<4x256xf32>
    %373 = arith.mulf %371, %372 : vector<4x256xf32>
    %374 = arith.addf %368, %373 : vector<4x256xf32>
    %c0_117 = arith.constant 0 : index
    %c17_118 = arith.constant 17 : index
    %375 = vector.load %arg5[%c0_117, %c17_118] : memref<4x36xf32, #tpu.memory_space<vmem>>, vector<4x1xf32>
    %376 = vector.extract_strided_slice %255 {offsets = [1, 0], sizes = [1, 256], strides = [1, 1]} : vector<4x256xf32> to vector<1x256xf32>
    %377 = vector.broadcast %375 : vector<4x1xf32> to vector<4x256xf32>
    %378 = vector.broadcast %376 : vector<1x256xf32> to vector<4x256xf32>
    %379 = arith.mulf %377, %378 : vector<4x256xf32>
    %380 = arith.addf %374, %379 : vector<4x256xf32>
    %c0_119 = arith.constant 0 : index
    %c18_120 = arith.constant 18 : index
    %381 = vector.load %arg5[%c0_119, %c18_120] : memref<4x36xf32, #tpu.memory_space<vmem>>, vector<4x1xf32>
    %382 = vector.extract_strided_slice %255 {offsets = [2, 0], sizes = [1, 256], strides = [1, 1]} : vector<4x256xf32> to vector<1x256xf32>
    %383 = vector.broadcast %381 : vector<4x1xf32> to vector<4x256xf32>
    %384 = vector.broadcast %382 : vector<1x256xf32> to vector<4x256xf32>
    %385 = arith.mulf %383, %384 : vector<4x256xf32>
    %386 = arith.addf %380, %385 : vector<4x256xf32>
    %c0_121 = arith.constant 0 : index
    %c19_122 = arith.constant 19 : index
    %387 = vector.load %arg5[%c0_121, %c19_122] : memref<4x36xf32, #tpu.memory_space<vmem>>, vector<4x1xf32>
    %388 = vector.extract_strided_slice %255 {offsets = [3, 0], sizes = [1, 256], strides = [1, 1]} : vector<4x256xf32> to vector<1x256xf32>
    %389 = vector.broadcast %387 : vector<4x1xf32> to vector<4x256xf32>
    %390 = vector.broadcast %388 : vector<1x256xf32> to vector<4x256xf32>
    %391 = arith.mulf %389, %390 : vector<4x256xf32>
    %392 = arith.addf %386, %391 : vector<4x256xf32>
    %c255_i32_123 = arith.constant 255 : i32
    %393 = tpu.dynamic_rotate %255 by %c255_i32_123 dim 1 : vector<4x256xf32>, i32 -> vector<4x256xf32>
    %c5_124 = arith.constant 5 : index
    %c0_125 = arith.constant 0 : index
    %c0_126 = arith.constant 0 : index
    %394 = vector.load %arg2[%c5_124, %c0_125, %c0_126] : memref<9x4x256xf32, #tpu.memory_space<vmem>>, vector<1x4x256xf32>
    %395 = vector.shape_cast %394 : vector<1x4x256xf32> to vector<4x256xf32>
    %396 = arith.mulf %393, %395 : vector<4x256xf32>
    %c0_127 = arith.constant 0 : index
    %c20_128 = arith.constant 20 : index
    %397 = vector.load %arg5[%c0_127, %c20_128] : memref<4x36xf32, #tpu.memory_space<vmem>>, vector<4x1xf32>
    %398 = vector.extract_strided_slice %396 {offsets = [0, 0], sizes = [1, 256], strides = [1, 1]} : vector<4x256xf32> to vector<1x256xf32>
    %399 = vector.broadcast %397 : vector<4x1xf32> to vector<4x256xf32>
    %400 = vector.broadcast %398 : vector<1x256xf32> to vector<4x256xf32>
    %401 = arith.mulf %399, %400 : vector<4x256xf32>
    %402 = arith.addf %392, %401 : vector<4x256xf32>
    %c0_129 = arith.constant 0 : index
    %c21_130 = arith.constant 21 : index
    %403 = vector.load %arg5[%c0_129, %c21_130] : memref<4x36xf32, #tpu.memory_space<vmem>>, vector<4x1xf32>
    %404 = vector.extract_strided_slice %396 {offsets = [1, 0], sizes = [1, 256], strides = [1, 1]} : vector<4x256xf32> to vector<1x256xf32>
    %405 = vector.broadcast %403 : vector<4x1xf32> to vector<4x256xf32>
    %406 = vector.broadcast %404 : vector<1x256xf32> to vector<4x256xf32>
    %407 = arith.mulf %405, %406 : vector<4x256xf32>
    %408 = arith.addf %402, %407 : vector<4x256xf32>
    %c0_131 = arith.constant 0 : index
    %c22_132 = arith.constant 22 : index
    %409 = vector.load %arg5[%c0_131, %c22_132] : memref<4x36xf32, #tpu.memory_space<vmem>>, vector<4x1xf32>
    %410 = vector.extract_strided_slice %396 {offsets = [2, 0], sizes = [1, 256], strides = [1, 1]} : vector<4x256xf32> to vector<1x256xf32>
    %411 = vector.broadcast %409 : vector<4x1xf32> to vector<4x256xf32>
    %412 = vector.broadcast %410 : vector<1x256xf32> to vector<4x256xf32>
    %413 = arith.mulf %411, %412 : vector<4x256xf32>
    %414 = arith.addf %408, %413 : vector<4x256xf32>
    %c0_133 = arith.constant 0 : index
    %c23_134 = arith.constant 23 : index
    %415 = vector.load %arg5[%c0_133, %c23_134] : memref<4x36xf32, #tpu.memory_space<vmem>>, vector<4x1xf32>
    %416 = vector.extract_strided_slice %396 {offsets = [3, 0], sizes = [1, 256], strides = [1, 1]} : vector<4x256xf32> to vector<1x256xf32>
    %417 = vector.broadcast %415 : vector<4x1xf32> to vector<4x256xf32>
    %418 = vector.broadcast %416 : vector<1x256xf32> to vector<4x256xf32>
    %419 = arith.mulf %417, %418 : vector<4x256xf32>
    %420 = arith.addf %414, %419 : vector<4x256xf32>
    %c241_i32_135 = arith.constant 241 : i32
    %421 = tpu.dynamic_rotate %255 by %c241_i32_135 dim 1 : vector<4x256xf32>, i32 -> vector<4x256xf32>
    %c6_136 = arith.constant 6 : index
    %c0_137 = arith.constant 0 : index
    %c0_138 = arith.constant 0 : index
    %422 = vector.load %arg2[%c6_136, %c0_137, %c0_138] : memref<9x4x256xf32, #tpu.memory_space<vmem>>, vector<1x4x256xf32>
    %423 = vector.shape_cast %422 : vector<1x4x256xf32> to vector<4x256xf32>
    %424 = arith.mulf %421, %423 : vector<4x256xf32>
    %c0_139 = arith.constant 0 : index
    %c24_140 = arith.constant 24 : index
    %425 = vector.load %arg5[%c0_139, %c24_140] : memref<4x36xf32, #tpu.memory_space<vmem>>, vector<4x1xf32>
    %426 = vector.extract_strided_slice %424 {offsets = [0, 0], sizes = [1, 256], strides = [1, 1]} : vector<4x256xf32> to vector<1x256xf32>
    %427 = vector.broadcast %425 : vector<4x1xf32> to vector<4x256xf32>
    %428 = vector.broadcast %426 : vector<1x256xf32> to vector<4x256xf32>
    %429 = arith.mulf %427, %428 : vector<4x256xf32>
    %430 = arith.addf %420, %429 : vector<4x256xf32>
    %c0_141 = arith.constant 0 : index
    %c25_142 = arith.constant 25 : index
    %431 = vector.load %arg5[%c0_141, %c25_142] : memref<4x36xf32, #tpu.memory_space<vmem>>, vector<4x1xf32>
    %432 = vector.extract_strided_slice %424 {offsets = [1, 0], sizes = [1, 256], strides = [1, 1]} : vector<4x256xf32> to vector<1x256xf32>
    %433 = vector.broadcast %431 : vector<4x1xf32> to vector<4x256xf32>
    %434 = vector.broadcast %432 : vector<1x256xf32> to vector<4x256xf32>
    %435 = arith.mulf %433, %434 : vector<4x256xf32>
    %436 = arith.addf %430, %435 : vector<4x256xf32>
    %c0_143 = arith.constant 0 : index
    %c26_144 = arith.constant 26 : index
    %437 = vector.load %arg5[%c0_143, %c26_144] : memref<4x36xf32, #tpu.memory_space<vmem>>, vector<4x1xf32>
    %438 = vector.extract_strided_slice %424 {offsets = [2, 0], sizes = [1, 256], strides = [1, 1]} : vector<4x256xf32> to vector<1x256xf32>
    %439 = vector.broadcast %437 : vector<4x1xf32> to vector<4x256xf32>
    %440 = vector.broadcast %438 : vector<1x256xf32> to vector<4x256xf32>
    %441 = arith.mulf %439, %440 : vector<4x256xf32>
    %442 = arith.addf %436, %441 : vector<4x256xf32>
    %c0_145 = arith.constant 0 : index
    %c27_146 = arith.constant 27 : index
    %443 = vector.load %arg5[%c0_145, %c27_146] : memref<4x36xf32, #tpu.memory_space<vmem>>, vector<4x1xf32>
    %444 = vector.extract_strided_slice %424 {offsets = [3, 0], sizes = [1, 256], strides = [1, 1]} : vector<4x256xf32> to vector<1x256xf32>
    %445 = vector.broadcast %443 : vector<4x1xf32> to vector<4x256xf32>
    %446 = vector.broadcast %444 : vector<1x256xf32> to vector<4x256xf32>
    %447 = arith.mulf %445, %446 : vector<4x256xf32>
    %448 = arith.addf %442, %447 : vector<4x256xf32>
    %c240_i32_147 = arith.constant 240 : i32
    %449 = tpu.dynamic_rotate %255 by %c240_i32_147 dim 1 : vector<4x256xf32>, i32 -> vector<4x256xf32>
    %c7_148 = arith.constant 7 : index
    %c0_149 = arith.constant 0 : index
    %c0_150 = arith.constant 0 : index
    %450 = vector.load %arg2[%c7_148, %c0_149, %c0_150] : memref<9x4x256xf32, #tpu.memory_space<vmem>>, vector<1x4x256xf32>
    %451 = vector.shape_cast %450 : vector<1x4x256xf32> to vector<4x256xf32>
    %452 = arith.mulf %449, %451 : vector<4x256xf32>
    %c0_151 = arith.constant 0 : index
    %c28_152 = arith.constant 28 : index
    %453 = vector.load %arg5[%c0_151, %c28_152] : memref<4x36xf32, #tpu.memory_space<vmem>>, vector<4x1xf32>
    %454 = vector.extract_strided_slice %452 {offsets = [0, 0], sizes = [1, 256], strides = [1, 1]} : vector<4x256xf32> to vector<1x256xf32>
    %455 = vector.broadcast %453 : vector<4x1xf32> to vector<4x256xf32>
    %456 = vector.broadcast %454 : vector<1x256xf32> to vector<4x256xf32>
    %457 = arith.mulf %455, %456 : vector<4x256xf32>
    %458 = arith.addf %448, %457 : vector<4x256xf32>
    %c0_153 = arith.constant 0 : index
    %c29_154 = arith.constant 29 : index
    %459 = vector.load %arg5[%c0_153, %c29_154] : memref<4x36xf32, #tpu.memory_space<vmem>>, vector<4x1xf32>
    %460 = vector.extract_strided_slice %452 {offsets = [1, 0], sizes = [1, 256], strides = [1, 1]} : vector<4x256xf32> to vector<1x256xf32>
    %461 = vector.broadcast %459 : vector<4x1xf32> to vector<4x256xf32>
    %462 = vector.broadcast %460 : vector<1x256xf32> to vector<4x256xf32>
    %463 = arith.mulf %461, %462 : vector<4x256xf32>
    %464 = arith.addf %458, %463 : vector<4x256xf32>
    %c0_155 = arith.constant 0 : index
    %c30_156 = arith.constant 30 : index
    %465 = vector.load %arg5[%c0_155, %c30_156] : memref<4x36xf32, #tpu.memory_space<vmem>>, vector<4x1xf32>
    %466 = vector.extract_strided_slice %452 {offsets = [2, 0], sizes = [1, 256], strides = [1, 1]} : vector<4x256xf32> to vector<1x256xf32>
    %467 = vector.broadcast %465 : vector<4x1xf32> to vector<4x256xf32>
    %468 = vector.broadcast %466 : vector<1x256xf32> to vector<4x256xf32>
    %469 = arith.mulf %467, %468 : vector<4x256xf32>
    %470 = arith.addf %464, %469 : vector<4x256xf32>
    %c0_157 = arith.constant 0 : index
    %c31_158 = arith.constant 31 : index
    %471 = vector.load %arg5[%c0_157, %c31_158] : memref<4x36xf32, #tpu.memory_space<vmem>>, vector<4x1xf32>
    %472 = vector.extract_strided_slice %452 {offsets = [3, 0], sizes = [1, 256], strides = [1, 1]} : vector<4x256xf32> to vector<1x256xf32>
    %473 = vector.broadcast %471 : vector<4x1xf32> to vector<4x256xf32>
    %474 = vector.broadcast %472 : vector<1x256xf32> to vector<4x256xf32>
    %475 = arith.mulf %473, %474 : vector<4x256xf32>
    %476 = arith.addf %470, %475 : vector<4x256xf32>
    %c239_i32_159 = arith.constant 239 : i32
    %477 = tpu.dynamic_rotate %255 by %c239_i32_159 dim 1 : vector<4x256xf32>, i32 -> vector<4x256xf32>
    %c8_160 = arith.constant 8 : index
    %c0_161 = arith.constant 0 : index
    %c0_162 = arith.constant 0 : index
    %478 = vector.load %arg2[%c8_160, %c0_161, %c0_162] : memref<9x4x256xf32, #tpu.memory_space<vmem>>, vector<1x4x256xf32>
    %479 = vector.shape_cast %478 : vector<1x4x256xf32> to vector<4x256xf32>
    %480 = arith.mulf %477, %479 : vector<4x256xf32>
    %c0_163 = arith.constant 0 : index
    %c32_164 = arith.constant 32 : index
    %481 = vector.load %arg5[%c0_163, %c32_164] : memref<4x36xf32, #tpu.memory_space<vmem>>, vector<4x1xf32>
    %482 = vector.extract_strided_slice %480 {offsets = [0, 0], sizes = [1, 256], strides = [1, 1]} : vector<4x256xf32> to vector<1x256xf32>
    %483 = vector.broadcast %481 : vector<4x1xf32> to vector<4x256xf32>
    %484 = vector.broadcast %482 : vector<1x256xf32> to vector<4x256xf32>
    %485 = arith.mulf %483, %484 : vector<4x256xf32>
    %486 = arith.addf %476, %485 : vector<4x256xf32>
    %c0_165 = arith.constant 0 : index
    %c33_166 = arith.constant 33 : index
    %487 = vector.load %arg5[%c0_165, %c33_166] : memref<4x36xf32, #tpu.memory_space<vmem>>, vector<4x1xf32>
    %488 = vector.extract_strided_slice %480 {offsets = [1, 0], sizes = [1, 256], strides = [1, 1]} : vector<4x256xf32> to vector<1x256xf32>
    %489 = vector.broadcast %487 : vector<4x1xf32> to vector<4x256xf32>
    %490 = vector.broadcast %488 : vector<1x256xf32> to vector<4x256xf32>
    %491 = arith.mulf %489, %490 : vector<4x256xf32>
    %492 = arith.addf %486, %491 : vector<4x256xf32>
    %c0_167 = arith.constant 0 : index
    %c34_168 = arith.constant 34 : index
    %493 = vector.load %arg5[%c0_167, %c34_168] : memref<4x36xf32, #tpu.memory_space<vmem>>, vector<4x1xf32>
    %494 = vector.extract_strided_slice %480 {offsets = [2, 0], sizes = [1, 256], strides = [1, 1]} : vector<4x256xf32> to vector<1x256xf32>
    %495 = vector.broadcast %493 : vector<4x1xf32> to vector<4x256xf32>
    %496 = vector.broadcast %494 : vector<1x256xf32> to vector<4x256xf32>
    %497 = arith.mulf %495, %496 : vector<4x256xf32>
    %498 = arith.addf %492, %497 : vector<4x256xf32>
    %c0_169 = arith.constant 0 : index
    %c35_170 = arith.constant 35 : index
    %499 = vector.load %arg5[%c0_169, %c35_170] : memref<4x36xf32, #tpu.memory_space<vmem>>, vector<4x1xf32>
    %500 = vector.extract_strided_slice %480 {offsets = [3, 0], sizes = [1, 256], strides = [1, 1]} : vector<4x256xf32> to vector<1x256xf32>
    %501 = vector.broadcast %499 : vector<4x1xf32> to vector<4x256xf32>
    %502 = vector.broadcast %500 : vector<1x256xf32> to vector<4x256xf32>
    %503 = arith.mulf %501, %502 : vector<4x256xf32>
    %504 = arith.addf %498, %503 : vector<4x256xf32>
    %c0_171 = arith.constant 0 : index
    %c0_172 = arith.constant 0 : index
    %505 = vector.load %arg6[%c0_171, %c0_172] : memref<4x1xf32, #tpu.memory_space<vmem>>, vector<4x1xf32>
    %506 = vector.broadcast %505 : vector<4x1xf32> to vector<4x256xf32>
    %507 = arith.addf %504, %506 : vector<4x256xf32>
    %508 = arith.addf %1, %507 : vector<4x256xf32>
    %c0_173 = arith.constant 0 : index
    %c0_174 = arith.constant 0 : index
    %c0_175 = arith.constant 0 : index
    %509 = vector.load %arg7[%c0_173, %c0_174, %c0_175] : memref<1x4x256xf32, #tpu.memory_space<vmem>>, vector<1x4x256xf32>
    %510 = vector.shape_cast %509 : vector<1x4x256xf32> to vector<4x256xf32>
    %511 = vector.shape_cast %508 : vector<4x256xf32> to vector<1x4x256xf32>
    tpu.vector_store %arg7[%c0_173, %c0_174, %c0_175], %511 {strides = array<i32>} : memref<1x4x256xf32, #tpu.memory_space<vmem>>, vector<1x4x256xf32>,
    return
  }
  func.func @transform_0(%arg0: i32) -> (i32, i32, i32) {
    %c0_i32 = arith.constant 0 : i32
    %c0_i32_0 = arith.constant 0 : i32
    %c0_i32_1 = arith.constant 0 : i32
    return %arg0, %c0_i32, %c0_i32_0 : i32, i32, i32
  }
  func.func @transform_1(%arg0: i32) -> (i32, i32, i32) {
    %c0_i32 = arith.constant 0 : i32
    %c0_i32_0 = arith.constant 0 : i32
    %c0_i32_1 = arith.constant 0 : i32
    %c0_i32_2 = arith.constant 0 : i32
    return %c0_i32, %c0_i32_0, %c0_i32_1 : i32, i32, i32
  }
  func.func @transform_2(%arg0: i32) -> (i32, i32) {
    %c0_i32 = arith.constant 0 : i32
    %c0_i32_0 = arith.constant 0 : i32
    %c0_i32_1 = arith.constant 0 : i32
    return %c0_i32, %c0_i32_0 : i32, i32
  }
  func.func @transform_3(%arg0: i32) -> (i32, i32) {
    %c0_i32 = arith.constant 0 : i32
    %c0_i32_0 = arith.constant 0 : i32
    %c0_i32_1 = arith.constant 0 : i32
    return %c0_i32, %c0_i32_0 : i32, i32
  }
  func.func @transform_4(%arg0: i32) -> (i32, i32) {
    %c0_i32 = arith.constant 0 : i32
    %c0_i32_0 = arith.constant 0 : i32
    %c0_i32_1 = arith.constant 0 : i32
    return %c0_i32, %c0_i32_0 : i32, i32
  }
  func.func @transform_5(%arg0: i32) -> (i32, i32) {
    %c0_i32 = arith.constant 0 : i32
    %c0_i32_0 = arith.constant 0 : i32
    %c0_i32_1 = arith.constant 0 : i32
    return %c0_i32, %c0_i32_0 : i32, i32
  }
  func.func @transform_6(%arg0: i32) -> (i32, i32, i32) {
    %c0_i32 = arith.constant 0 : i32
    %c0_i32_0 = arith.constant 0 : i32
    %c0_i32_1 = arith.constant 0 : i32
    return %arg0, %c0_i32, %c0_i32_0 : i32, i32, i32
  }
}

</mosaic_0001>

<llo_original>
// kernel: tpu_custom_call.1
$region0: #{tpu_custom_call.1}
  #allocation0 [shape = 'u32[]', space=smem, size = 0x4, offset = 0x4, fixed_abs, tag = 'smem constant byte address 0x4 - core index']
  #allocation1 [shape = 'u32[72,128]{1,0:T(1,128)}', space=vmem, size = 0x9000, scoped, tag = 'internal scratch']
  %s0 = inlined_call_operand.hbm [shape: f32[2,4,256], index: 0, kind: input, shape index: {}]
  %s1 = inlined_call_operand.hbm [shape: f32[9,4,256], index: 1, kind: input, shape index: {}]
  %s2 = inlined_call_operand.vmem [shape: f32[4,36], index: 2, kind: input, shape index: {}]
  %s3 = inlined_call_operand.vmem [shape: f32[4,1], index: 3, kind: input, shape index: {}]
  %s4 = inlined_call_operand.vmem [shape: f32[4,36], index: 4, kind: input, shape index: {}]
  %s5 = inlined_call_operand.vmem [shape: f32[4,1], index: 5, kind: input, shape index: {}]
  %s6 = inlined_call_operand.hbm [shape: f32[2,4,256], index: 6, kind: output, shape index: {}]
  %s7 = sld [smem:[#allocation0]]
  $region65: #{tpu_custom_call.1} parent=0
    _
  %s9 = ssub.s32 1, %s7
  %s10 = scalar_select 0, %s9, %s7
  $region1: #{tpu_custom_call.1} parent=0
    #allocation2 [shape = 'u8[8192]{0}', space=vmem, size = 0x2000, scoped, tag = 'input window, operand 0']
    #allocation3 [shape = 's32[2]{0}', space=sflag, size = 0x8, scoped, tag = 'scoped memory for tpu_custom_call.1']
    #allocation4 [shape = 's32[2]{0}', space=sflag, size = 0x8, scoped, tag = 'scoped memory for tpu_custom_call.1']
    #allocation5 [shape = 'u8[36864]{0}', space=vmem, size = 0x9000, scoped, tag = 'input window, operand 1, single buffered']
    #allocation6 [shape = 's32[1]{0}', space=sflag, size = 0x4, scoped, tag = 'scoped memory for tpu_custom_call.1']
    #allocation7 [shape = 'u8[8192]{0}', space=vmem, size = 0x2000, scoped, tag = 'output window, operand 0']
    %11 = vsyncpa [#allocation3], 0
    %s12 = scalar_lea.sflag [#allocation3], 1
    %13 = vsyncpa %s12, 0
    %14 = vsyncpa [#allocation6], 0
    %15 = vsyncpa [#allocation4], 0
    %s16 = scalar_lea.sflag [#allocation4], 1
    %17 = vsyncpa %s16, 0
    loop: start=0, step=1, limit=4
    $region2: #{tpu_custom_call.1} parent=1 // loop_pre_header
      _
    $region3: #{tpu_custom_call.1} parent=1 // loop_header
      %s19 = sphi 0, %s23
      %p20 = scmp.ge.s32.totalorder %s19, 4
      %s29 = sphi 0, %s31
      %s32 = sphi 0, %s29
      %s33 = sphi 0, %s32
      %s49 = sphi 0, %s33
      %s53 = sphi 0, %s53
      %s55 = sphi 0, %s53
      %s56 = sphi 0, %s55
      %s70 = sphi 0, %s56
      %s74 = sphi 0, %s74
      %s76 = sphi 0, %s74
      %s77 = sphi 0, %s76
      %s91 = sphi 0, %s77
      %s95 = sphi 0, %s95
      %s97 = sphi 0, %s95
      %s98 = sphi 0, %s97
      %s112 = sphi 0, %s98
      %s116 = sphi 0, %s116
      %s118 = sphi 0, %s116
      %s119 = sphi 0, %s118
      %s133 = sphi 0, %s119
      %s137 = sphi 0, %s137
      %s139 = sphi 0, %s137
      %s140 = sphi 0, %s139
      %s154 = sphi 0, %s140
      %s160 = sphi 0, %s162
      %s163 = sphi 0, %s160
      %s164 = sphi 0, %s163
      %s180 = sphi 0, %s164
    $region4: #{tpu_custom_call.1} parent=1 // loop_header_branch
      %22 = sbr.rel (%p20) target = $region8
    $region5: #{tpu_custom_call.1} parent=1 // loop_body
      %s24 = ssub.s32 %s19, 1
      %s25 = ssub.s32 %s19, 2
      %s26 = sadd.s32 %s19, 1
      %s27 = ssub.s32 %s19, %s26
      %p28 = scmp.eq.s32.totalorder %s27, 0
      %s30 = sadd.s32 %s29, 1
      %s31 = scalar_select %p28, %s29, %s30
      %p34 = pneg %p28
      %p35 = scmp.eq.s32.totalorder %s19, 1
      %p36 = por %p34, %p35
      %p37 = scmp.ne.s32.totalorder %s29, %s32
      %p38 = scmp.eq.s32.totalorder %s19, 0
      %p39 = por %p37, %p38
      %p40 = scmp.ne.s32.totalorder %s29, %s32
      %p41 = scmp.eq.s32.totalorder %s24, 1
      %p42 = por %p40, %p41
      %p43 = scmp.ne.s32.totalorder %s32, %s33
      %p44 = scmp.eq.s32.totalorder %s24, 0
      %p45 = por %p43, %p44
      %p46 = scmp.ne.s32.totalorder %s32, %s33
      %p47 = scmp.eq.s32.totalorder %s25, 1
      %p48 = por %p46, %p47
      %p50 = scmp.ne.s32.totalorder %s33, %s49
      %p51 = scmp.eq.s32.totalorder %s25, 0
      %p52 = por %p50, %p51
      %s54 = sadd.s32 %s53, 1
      %p57 = scmp.eq.s32.totalorder %s19, 1
      %p58 = scmp.ne.s32.totalorder %s53, %s55
      %p59 = scmp.eq.s32.totalorder %s19, 0
      %p60 = por %p58, %p59
      %p61 = scmp.ne.s32.totalorder %s53, %s55
      %p62 = scmp.eq.s32.totalorder %s24, 1
      %p63 = por %p61, %p62
      %p64 = scmp.ne.s32.totalorder %s55, %s56
      %p65 = scmp.eq.s32.totalorder %s24, 0
      %p66 = por %p64, %p65
      %p67 = scmp.ne.s32.totalorder %s55, %s56
      %p68 = scmp.eq.s32.totalorder %s25, 1
      %p69 = por %p67, %p68
      %p71 = scmp.ne.s32.totalorder %s56, %s70
      %p72 = scmp.eq.s32.totalorder %s25, 0
      %p73 = por %p71, %p72
      %s75 = sadd.s32 %s74, 1
      %p78 = scmp.eq.s32.totalorder %s19, 1
      %p79 = scmp.ne.s32.totalorder %s74, %s76
      %p80 = scmp.eq.s32.totalorder %s19, 0
      %p81 = por %p79, %p80
      %p82 = scmp.ne.s32.totalorder %s74, %s76
      %p83 = scmp.eq.s32.totalorder %s24, 1
      %p84 = por %p82, %p83
      %p85 = scmp.ne.s32.totalorder %s76, %s77
      %p86 = scmp.eq.s32.totalorder %s24, 0
      %p87 = por %p85, %p86
      %p88 = scmp.ne.s32.totalorder %s76, %s77
      %p89 = scmp.eq.s32.totalorder %s25, 1
      %p90 = por %p88, %p89
      %p92 = scmp.ne.s32.totalorder %s77, %s91
      %p93 = scmp.eq.s32.totalorder %s25, 0
      %p94 = por %p92, %p93
      %s96 = sadd.s32 %s95, 1
      %p99 = scmp.eq.s32.totalorder %s19, 1
      %p100 = scmp.ne.s32.totalorder %s95, %s97
      %p101 = scmp.eq.s32.totalorder %s19, 0
      %p102 = por %p100, %p101
      %p103 = scmp.ne.s32.totalorder %s95, %s97
      %p104 = scmp.eq.s32.totalorder %s24, 1
      %p105 = por %p103, %p104
      %p106 = scmp.ne.s32.totalorder %s97, %s98
      %p107 = scmp.eq.s32.totalorder %s24, 0
      %p108 = por %p106, %p107
      %p109 = scmp.ne.s32.totalorder %s97, %s98
      %p110 = scmp.eq.s32.totalorder %s25, 1
      %p111 = por %p109, %p110
      %p113 = scmp.ne.s32.totalorder %s98, %s112
      %p114 = scmp.eq.s32.totalorder %s25, 0
      %p115 = por %p113, %p114
      %s117 = sadd.s32 %s116, 1
      %p120 = scmp.eq.s32.totalorder %s19, 1
      %p121 = scmp.ne.s32.totalorder %s116, %s118
      %p122 = scmp.eq.s32.totalorder %s19, 0
      %p123 = por %p121, %p122
      %p124 = scmp.ne.s32.totalorder %s116, %s118
      %p125 = scmp.eq.s32.totalorder %s24, 1
      %p126 = por %p124, %p125
      %p127 = scmp.ne.s32.totalorder %s118, %s119
      %p128 = scmp.eq.s32.totalorder %s24, 0
      %p129 = por %p127, %p128
      %p130 = scmp.ne.s32.totalorder %s118, %s119
      %p131 = scmp.eq.s32.totalorder %s25, 1
      %p132 = por %p130, %p131
      %p134 = scmp.ne.s32.totalorder %s119, %s133
      %p135 = scmp.eq.s32.totalorder %s25, 0
      %p136 = por %p134, %p135
      %s138 = sadd.s32 %s137, 1
      %p141 = scmp.eq.s32.totalorder %s19, 1
      %p142 = scmp.ne.s32.totalorder %s137, %s139
      %p143 = scmp.eq.s32.totalorder %s19, 0
      %p144 = por %p142, %p143
      %p145 = scmp.ne.s32.totalorder %s137, %s139
      %p146 = scmp.eq.s32.totalorder %s24, 1
      %p147 = por %p145, %p146
      %p148 = scmp.ne.s32.totalorder %s139, %s140
      %p149 = scmp.eq.s32.totalorder %s24, 0
      %p150 = por %p148, %p149
      %p151 = scmp.ne.s32.totalorder %s139, %s140
      %p152 = scmp.eq.s32.totalorder %s25, 1
      %p153 = por %p151, %p152
      %p155 = scmp.ne.s32.totalorder %s140, %s154
      %p156 = scmp.eq.s32.totalorder %s25, 0
      %p157 = por %p155, %p156
      %s158 = ssub.s32 %s19, %s26
      %p159 = scmp.eq.s32.totalorder %s158, 0
      %s161 = sadd.s32 %s160, 1
      %s162 = scalar_select %p159, %s160, %s161
      %p165 = pneg %p159
      %p166 = scmp.eq.s32.totalorder %s19, 1
      %p167 = por %p165, %p166
      %p168 = scmp.ne.s32.totalorder %s160, %s163
      %p169 = scmp.eq.s32.totalorder %s19, 0
      %p170 = por %p168, %p169
      %p171 = scmp.ne.s32.totalorder %s160, %s163
      %p172 = scmp.eq.s32.totalorder %s24, 1
      %p173 = por %p171, %p172
      %p174 = scmp.ne.s32.totalorder %s163, %s164
      %p175 = scmp.eq.s32.totalorder %s24, 0
      %p176 = por %p174, %p175
      %p177 = scmp.ne.s32.totalorder %s163, %s164
      %p178 = scmp.eq.s32.totalorder %s25, 1
      %p179 = por %p177, %p178
      %p181 = scmp.ne.s32.totalorder %s164, %s180
      %p182 = scmp.eq.s32.totalorder %s25, 0
      %p183 = por %p181, %p182
      %p184 = scmp.le.s32.totalorder 1, %s19
      %p185 = scmp.lt.s32.totalorder %s19, 3
      %p186 = pnand %p184, %p185
      %p187 = pneg %p186
      // Predicated region
      $region9: #{tpu_custom_call.1} parent=5 // pred_check
        _
      $region10: #{tpu_custom_call.1} parent=5 // pred_check_branch
        %189 = sbr.rel (%p186) target = $region12
      $region11: #{tpu_custom_call.1} parent=5 // pred_region
        %s190 = ssub.s32 %s19, 1
        // Predicated region
        $region13: #{tpu_custom_call.1} parent=11 // pred_check
          %p191 = pneg %p66
        $region14: #{tpu_custom_call.1} parent=11 // pred_check_branch
          %193 = sbr.rel (%p191) target = $region16
        $region15: #{tpu_custom_call.1} parent=11 // pred_region
          %195 = vsyncadd [#allocation6], 0
          %s196 = sshll.u32 %s1, 4
          %s197 = int_to_ptr.hbm [resolvable:$true] %s196
          %s198 = sshll.u32 [#allocation5], 4
          %s199 = int_to_ptr.vmem [resolvable:$true] %s198
          %204 = dma.hbm_to_vmem [thread:$0]  %s197, 1152, %s199, [#allocation6], 128, 128, 8
        $region16: #{tpu_custom_call.1} parent=11 // pred_fallthru
          _
        // Predicated region
        $region17: #{tpu_custom_call.1} parent=11 // pred_check
          %p205 = pneg %p87
        $region18: #{tpu_custom_call.1} parent=11 // pred_check_branch
          %207 = sbr.rel (%p205) target = $region20
        $region19: #{tpu_custom_call.1} parent=11 // pred_region
          _
        $region20: #{tpu_custom_call.1} parent=11 // pred_fallthru
          _
        // Predicated region
        $region21: #{tpu_custom_call.1} parent=11 // pred_check
          %p208 = pneg %p108
        $region22: #{tpu_custom_call.1} parent=11 // pred_check_branch
          %210 = sbr.rel (%p208) target = $region24
        $region23: #{tpu_custom_call.1} parent=11 // pred_region
          _
        $region24: #{tpu_custom_call.1} parent=11 // pred_fallthru
          _
        // Predicated region
        $region25: #{tpu_custom_call.1} parent=11 // pred_check
          %p211 = pneg %p129
        $region26: #{tpu_custom_call.1} parent=11 // pred_check_branch
          %213 = sbr.rel (%p211) target = $region28
        $region27: #{tpu_custom_call.1} parent=11 // pred_region
          _
        $region28: #{tpu_custom_call.1} parent=11 // pred_fallthru
          _
        // Predicated region
        $region29: #{tpu_custom_call.1} parent=11 // pred_check
          %p214 = pneg %p150
        $region30: #{tpu_custom_call.1} parent=11 // pred_check_branch
          %216 = sbr.rel (%p214) target = $region32
        $region31: #{tpu_custom_call.1} parent=11 // pred_region
          _
        $region32: #{tpu_custom_call.1} parent=11 // pred_fallthru
          _
      $region12: #{tpu_custom_call.1} parent=5 // pred_fallthru
        _
      %p217 = scmp.lt.s32.totalorder %s19, 2
      // Predicated region
      $region33: #{tpu_custom_call.1} parent=5 // pred_check
        %p218 = pneg %p217
      $region34: #{tpu_custom_call.1} parent=5 // pred_check_branch
        %220 = sbr.rel (%p218) target = $region36
      $region35: #{tpu_custom_call.1} parent=5 // pred_region
        // Predicated region
        $region37: #{tpu_custom_call.1} parent=35 // pred_check
          %p221 = pneg %p39
        $region38: #{tpu_custom_call.1} parent=35 // pred_check_branch
          %223 = sbr.rel (%p221) target = $region40
        $region39: #{tpu_custom_call.1} parent=35 // pred_region
          %s224 = sand.u32 %s29, 1
          %s225 = scalar_lea.sflag [#allocation3], %s224
          %s226 = sand.u32 %s29, 1
          %s227 = smul.addr %s226, 8
          %s228 = scalar_lea.vmem [#allocation2], %s227
          %230 = vsyncadd %s225, 0
          %s231 = smul.addr %s19, 2
          %s232 = smul.addr %s231, 4
          %s233 = scalar_lea.hbm %s0, %s232
          %s235 = sshll.u32 %s233, 4
          %s236 = int_to_ptr.hbm [resolvable:$true] %s235
          %s237 = sshll.u32 %s228, 4
          %s238 = int_to_ptr.vmem [resolvable:$true] %s237
          %240 = dma.hbm_to_vmem [thread:$0]  %s236, 128, %s238, %s225
        $region40: #{tpu_custom_call.1} parent=35 // pred_fallthru
          _
      $region36: #{tpu_custom_call.1} parent=5 // pred_fallthru
        _
      %p241 = scmp.le.s32.totalorder 1, %s19
      %p242 = scmp.lt.s32.totalorder %s19, 3
      %p243 = pnand %p241, %p242
      %p244 = pneg %p243
      // Predicated region
      $region41: #{tpu_custom_call.1} parent=5 // pred_check
        _
      $region42: #{tpu_custom_call.1} parent=5 // pred_check_branch
        %246 = sbr.rel (%p243) target = $region44
      $region43: #{tpu_custom_call.1} parent=5 // pred_region
        %s247 = ssub.s32 %s19, 1
        %s248 = sand.u32 %s32, 1
        %s249 = scalar_lea.sflag [#allocation3], %s248
        %s250 = sand.u32 %s32, 1
        %s251 = smul.addr %s250, 8
        %s252 = scalar_lea.vmem [#allocation2], %s251
        // Predicated region
        $region45: #{tpu_custom_call.1} parent=43 // pred_check
          %p253 = pneg %p45
        $region46: #{tpu_custom_call.1} parent=43 // pred_check_branch
          %255 = sbr.rel (%p253) target = $region48
        $region47: #{tpu_custom_call.1} parent=43 // pred_region
          %257 = dma.done %s249, 128
        $region48: #{tpu_custom_call.1} parent=43 // pred_fallthru
          _
        // Predicated region
        $region49: #{tpu_custom_call.1} parent=43 // pred_check
          %p258 = pneg %p66
        $region50: #{tpu_custom_call.1} parent=43 // pred_check_branch
          %260 = sbr.rel (%p258) target = $region52
        $region51: #{tpu_custom_call.1} parent=43 // pred_region
          %262 = dma.done [#allocation6], 1152
        $region52: #{tpu_custom_call.1} parent=43 // pred_fallthru
          _
        %s263 = sand.u32 %s32, 1
        %s264 = scalar_lea.sflag [#allocation3], %s263
        %s265 = sand.u32 %s32, 1
        %s266 = smul.addr %s265, 8
        %s267 = scalar_lea.vmem [#allocation2], %s266
        %p268 = pneg %p45
        %p269 = pneg %p42
        %p270 = pneg %p66
        %p271 = pneg %p63
        %p272 = pneg %p87
        %p273 = pneg %p84
        %p274 = pneg %p108
        %p275 = pneg %p105
        %p276 = pneg %p129
        %p277 = pneg %p126
        %p278 = pneg %p150
        %p279 = pneg %p147
        %p280 = pneg %p176
        %p281 = pneg %p173
        %s282 = sand.u32 %s163, 1
        %s283 = scalar_lea.sflag [#allocation4], %s282
        %s284 = sand.u32 %s163, 1
        %s285 = smul.addr %s284, 8
        %s286 = scalar_lea.vmem [#allocation7], %s285
        %v287 = vld [vmem:[%s252] sm:$0xff]
        %289 = vst [vmem:[#allocation1] ss:$2 sm:$0xff] %v287
        %v290 = vld.sshfl [vmem:[#allocation1] sm:$0xff pattern:$0x75316420]
        %v291 = vld.sshfl [vmem:[#allocation1 + $0x8] sm:$0xff pattern:$0x75316420]
        %294 = vrot.lane.b32.xlu0 %v290, 17
        %v295 = vpop.permute.xlu0 %294
        %296 = vrot.lane.b32.xlu0 %v291, 17
        %v297 = vpop.permute.xlu0 %296
        %v298 = vlaneseq
        %v299 = vand.u32 %v298, 127
        %vm300 = vcmp.lt.s32.totalorder %v299, 17
        %v301 = vsel %vm300, %v295, %v297
        %v302 = vsel %vm300, %v297, %v295
        %v303 = vld [vmem:[#allocation5] sm:$0xff]
        %305 = vst [vmem:[#allocation1] ss:$2 sm:$0xff] %v303
        %v306 = vld.sshfl [vmem:[#allocation1] sm:$0xff pattern:$0x75316420]
        %v307 = vld.sshfl [vmem:[#allocation1 + $0x8] sm:$0xff pattern:$0x75316420]
        %v310 = vmul.f32 %v302, %v306
        %v311 = vmul.f32 %v301, %v307
        %v312 = vld [vmem:[%s2] sm:$0xf]
        %314 = vset.pattern.permute.xlu0 0
        %315 = vperm.xlu0 %314, %v312
        %v316 = vpop.permute.xlu0 %315
        %v318 = vperm.slane %v310, 0
        %v319 = vperm.slane %v311, 0
        %v320 = vmul.f32 %v316, %v318
        %v321 = vmul.f32 %v316, %v319
        %v322 = vadd.f32 %v320, 0.0
        %v323 = vadd.f32 %v321, 0.0
        %324 = vset.pattern.permute.xlu0 1
        %325 = vperm.xlu0 %324, %v312
        %v326 = vpop.permute.xlu0 %325
        %v328 = vperm.slane %v310, 1
        %v329 = vperm.slane %v311, 1
        %v330 = vmul.f32 %v326, %v328
        %v331 = vmul.f32 %v326, %v329
        %v332 = vadd.f32 %v322, %v330
        %v333 = vadd.f32 %v323, %v331
        %334 = vset.pattern.permute.xlu0 2
        %335 = vperm.xlu0 %334, %v312
        %v336 = vpop.permute.xlu0 %335
        %v338 = vperm.slane %v310, 2
        %v339 = vperm.slane %v311, 2
        %v340 = vmul.f32 %v336, %v338
        %v341 = vmul.f32 %v336, %v339
        %v342 = vadd.f32 %v332, %v340
        %v343 = vadd.f32 %v333, %v341
        %344 = vset.pattern.permute.xlu0 3
        %345 = vperm.xlu0 %344, %v312
        %v346 = vpop.permute.xlu0 %345
        %v348 = vperm.slane %v310, 3
        %v349 = vperm.slane %v311, 3
        %v350 = vmul.f32 %v346, %v348
        %v351 = vmul.f32 %v346, %v349
        %v352 = vadd.f32 %v342, %v350
        %v353 = vadd.f32 %v343, %v351
        %354 = vst [vmem:[#allocation1] ss:$2 sm:$0xff] %v287
        %v355 = vld.sshfl [vmem:[#allocation1] sm:$0xff pattern:$0x75316420]
        %v356 = vld.sshfl [vmem:[#allocation1 + $0x8] sm:$0xff pattern:$0x75316420]
        %359 = vrot.lane.b32.xlu0 %v355, 16
        %v360 = vpop.permute.xlu0 %359
        %361 = vrot.lane.b32.xlu0 %v356, 16
        %v362 = vpop.permute.xlu0 %361
        %vm363 = vcmp.lt.s32.totalorder %v299, 16
        %v364 = vsel %vm363, %v360, %v362
        %v365 = vsel %vm363, %v362, %v360
        %s366 = scalar_lea.vmem [#allocation5], 8
        %v367 = vld [vmem:[%s366] sm:$0xff]
        %369 = vst [vmem:[#allocation1] ss:$2 sm:$0xff] %v367
        %v370 = vld.sshfl [vmem:[#allocation1] sm:$0xff pattern:$0x75316420]
        %v371 = vld.sshfl [vmem:[#allocation1 + $0x8] sm:$0xff pattern:$0x75316420]
        %v374 = vmul.f32 %v365, %v370
        %v375 = vmul.f32 %v364, %v371
        %v376 = vld [vmem:[%s2] sm:$0xf]
        %378 = vset.pattern.permute.xlu0 4
        %379 = vperm.xlu0 %378, %v376
        %v380 = vpop.permute.xlu0 %379
        %v382 = vperm.slane %v374, 0
        %v383 = vperm.slane %v375, 0
        %v384 = vmul.f32 %v380, %v382
        %v385 = vmul.f32 %v380, %v383
        %v386 = vadd.f32 %v352, %v384
        %v387 = vadd.f32 %v353, %v385
        %388 = vset.pattern.permute.xlu0 5
        %389 = vperm.xlu0 %388, %v376
        %v390 = vpop.permute.xlu0 %389
        %v392 = vperm.slane %v374, 1
        %v393 = vperm.slane %v375, 1
        %v394 = vmul.f32 %v390, %v392
        %v395 = vmul.f32 %v390, %v393
        %v396 = vadd.f32 %v386, %v394
        %v397 = vadd.f32 %v387, %v395
        %398 = vset.pattern.permute.xlu0 6
        %399 = vperm.xlu0 %398, %v376
        %v400 = vpop.permute.xlu0 %399
        %v402 = vperm.slane %v374, 2
        %v403 = vperm.slane %v375, 2
        %v404 = vmul.f32 %v400, %v402
        %v405 = vmul.f32 %v400, %v403
        %v406 = vadd.f32 %v396, %v404
        %v407 = vadd.f32 %v397, %v405
        %408 = vset.pattern.permute.xlu0 7
        %409 = vperm.xlu0 %408, %v376
        %v410 = vpop.permute.xlu0 %409
        %v412 = vperm.slane %v374, 3
        %v413 = vperm.slane %v375, 3
        %v414 = vmul.f32 %v410, %v412
        %v415 = vmul.f32 %v410, %v413
        %v416 = vadd.f32 %v406, %v414
        %v417 = vadd.f32 %v407, %v415
        %418 = vst [vmem:[#allocation1] ss:$2 sm:$0xff] %v287
        %v419 = vld.sshfl [vmem:[#allocation1] sm:$0xff pattern:$0x75316420]
        %v420 = vld.sshfl [vmem:[#allocation1 + $0x8] sm:$0xff pattern:$0x75316420]
        %423 = vrot.lane.b32.xlu0 %v419, 15
        %v424 = vpop.permute.xlu0 %423
        %425 = vrot.lane.b32.xlu0 %v420, 15
        %v426 = vpop.permute.xlu0 %425
        %vm427 = vcmp.lt.s32.totalorder %v299, 15
        %v428 = vsel %vm427, %v424, %v426
        %v429 = vsel %vm427, %v426, %v424
        %s430 = scalar_lea.vmem [#allocation5], 16
        %v431 = vld [vmem:[%s430] sm:$0xff]
        %433 = vst [vmem:[#allocation1] ss:$2 sm:$0xff] %v431
        %v434 = vld.sshfl [vmem:[#allocation1] sm:$0xff pattern:$0x75316420]
        %v435 = vld.sshfl [vmem:[#allocation1 + $0x8] sm:$0xff pattern:$0x75316420]
        %v438 = vmul.f32 %v429, %v434
        %v439 = vmul.f32 %v428, %v435
        %v440 = vld [vmem:[%s2] sm:$0xf]
        %442 = vset.pattern.permute.xlu0 8
        %443 = vperm.xlu0 %442, %v440
        %v444 = vpop.permute.xlu0 %443
        %v446 = vperm.slane %v438, 0
        %v447 = vperm.slane %v439, 0
        %v448 = vmul.f32 %v444, %v446
        %v449 = vmul.f32 %v444, %v447
        %v450 = vadd.f32 %v416, %v448
        %v451 = vadd.f32 %v417, %v449
        %452 = vset.pattern.permute.xlu0 9
        %453 = vperm.xlu0 %452, %v440
        %v454 = vpop.permute.xlu0 %453
        %v456 = vperm.slane %v438, 1
        %v457 = vperm.slane %v439, 1
        %v458 = vmul.f32 %v454, %v456
        %v459 = vmul.f32 %v454, %v457
        %v460 = vadd.f32 %v450, %v458
        %v461 = vadd.f32 %v451, %v459
        %462 = vset.pattern.permute.xlu0 10
        %463 = vperm.xlu0 %462, %v440
        %v464 = vpop.permute.xlu0 %463
        %v466 = vperm.slane %v438, 2
        %v467 = vperm.slane %v439, 2
        %v468 = vmul.f32 %v464, %v466
        %v469 = vmul.f32 %v464, %v467
        %v470 = vadd.f32 %v460, %v468
        %v471 = vadd.f32 %v461, %v469
        %472 = vset.pattern.permute.xlu0 11
        %473 = vperm.xlu0 %472, %v440
        %v474 = vpop.permute.xlu0 %473
        %v476 = vperm.slane %v438, 3
        %v477 = vperm.slane %v439, 3
        %v478 = vmul.f32 %v474, %v476
        %v479 = vmul.f32 %v474, %v477
        %v480 = vadd.f32 %v470, %v478
        %v481 = vadd.f32 %v471, %v479
        %482 = vst [vmem:[#allocation1] ss:$2 sm:$0xff] %v287
        %v483 = vld.sshfl [vmem:[#allocation1] sm:$0xff pattern:$0x75316420]
        %v484 = vld.sshfl [vmem:[#allocation1 + $0x8] sm:$0xff pattern:$0x75316420]
        %487 = vrot.lane.b32.xlu0 %v483, 1
        %v488 = vpop.permute.xlu0 %487
        %489 = vrot.lane.b32.xlu0 %v484, 1
        %v490 = vpop.permute.xlu0 %489
        %vm491 = vcmp.lt.s32.totalorder %v299, 1
        %v492 = vsel %vm491, %v488, %v490
        %v493 = vsel %vm491, %v490, %v488
        %s494 = scalar_lea.vmem [#allocation5], 24
        %v495 = vld [vmem:[%s494] sm:$0xff]
        %497 = vst [vmem:[#allocation1] ss:$2 sm:$0xff] %v495
        %v498 = vld.sshfl [vmem:[#allocation1] sm:$0xff pattern:$0x75316420]
        %v499 = vld.sshfl [vmem:[#allocation1 + $0x8] sm:$0xff pattern:$0x75316420]
        %v502 = vmul.f32 %v493, %v498
        %v503 = vmul.f32 %v492, %v499
        %v504 = vld [vmem:[%s2] sm:$0xf]
        %506 = vset.pattern.permute.xlu0 12
        %507 = vperm.xlu0 %506, %v504
        %v508 = vpop.permute.xlu0 %507
        %v510 = vperm.slane %v502, 0
        %v511 = vperm.slane %v503, 0
        %v512 = vmul.f32 %v508, %v510
        %v513 = vmul.f32 %v508, %v511
        %v514 = vadd.f32 %v480, %v512
        %v515 = vadd.f32 %v481, %v513
        %516 = vset.pattern.permute.xlu0 13
        %517 = vperm.xlu0 %516, %v504
        %v518 = vpop.permute.xlu0 %517
        %v520 = vperm.slane %v502, 1
        %v521 = vperm.slane %v503, 1
        %v522 = vmul.f32 %v518, %v520
        %v523 = vmul.f32 %v518, %v521
        %v524 = vadd.f32 %v514, %v522
        %v525 = vadd.f32 %v515, %v523
        %526 = vset.pattern.permute.xlu0 14
        %527 = vperm.xlu0 %526, %v504
        %v528 = vpop.permute.xlu0 %527
        %v530 = vperm.slane %v502, 2
        %v531 = vperm.slane %v503, 2
        %v532 = vmul.f32 %v528, %v530
        %v533 = vmul.f32 %v528, %v531
        %v534 = vadd.f32 %v524, %v532
        %v535 = vadd.f32 %v525, %v533
        %536 = vset.pattern.permute.xlu0 15
        %537 = vperm.xlu0 %536, %v504
        %v538 = vpop.permute.xlu0 %537
        %v540 = vperm.slane %v502, 3
        %v541 = vperm.slane %v503, 3
        %v542 = vmul.f32 %v538, %v540
        %v543 = vmul.f32 %v538, %v541
        %v544 = vadd.f32 %v534, %v542
        %v545 = vadd.f32 %v535, %v543
        %546 = vset.pattern.permute.xlu0 16
        %547 = vperm.xlu0 %546, %v504
        %v548 = vpop.permute.xlu0 %547
        %v550 = vperm.slane %v287, 0
        %v551 = vperm.slane %v287, 4
        %v554 = vperm.slane %v550, 0
        %v555 = vperm.slane %v551, 0
        %v556 = vmul.f32 %v548, %v554
        %v557 = vmul.f32 %v548, %v555
        %v558 = vadd.f32 %v544, %v556
        %v559 = vadd.f32 %v545, %v557
        %560 = vset.pattern.permute.xlu0 17
        %561 = vperm.xlu0 %560, %v504
        %v562 = vpop.permute.xlu0 %561
        %v564 = vperm.slane %v287, 1
        %v565 = vperm.slane %v287, 5
        %v568 = vperm.slane %v564, 1
        %v569 = vperm.slane %v565, 1
        %v570 = vmul.f32 %v562, %v568
        %v571 = vmul.f32 %v562, %v569
        %v572 = vadd.f32 %v558, %v570
        %v573 = vadd.f32 %v559, %v571
        %574 = vset.pattern.permute.xlu0 18
        %575 = vperm.xlu0 %574, %v504
        %v576 = vpop.permute.xlu0 %575
        %v578 = vperm.slane %v287, 2
        %v579 = vperm.slane %v287, 6
        %v582 = vperm.slane %v578, 2
        %v583 = vperm.slane %v579, 2
        %v584 = vmul.f32 %v576, %v582
        %v585 = vmul.f32 %v576, %v583
        %v586 = vadd.f32 %v572, %v584
        %v587 = vadd.f32 %v573, %v585
        %588 = vset.pattern.permute.xlu0 19
        %589 = vperm.xlu0 %588, %v504
        %v590 = vpop.permute.xlu0 %589
        %v592 = vperm.slane %v287, 3
        %v593 = vperm.slane %v287, 7
        %v596 = vperm.slane %v592, 3
        %v597 = vperm.slane %v593, 3
        %v598 = vmul.f32 %v590, %v596
        %v599 = vmul.f32 %v590, %v597
        %v600 = vadd.f32 %v586, %v598
        %v601 = vadd.f32 %v587, %v599
        %602 = vst [vmem:[#allocation1] ss:$2 sm:$0xff] %v287
        %v603 = vld.sshfl [vmem:[#allocation1] sm:$0xff pattern:$0x75316420]
        %v604 = vld.sshfl [vmem:[#allocation1 + $0x8] sm:$0xff pattern:$0x75316420]
        %607 = vrot.lane.b32.xlu0 %v603, 127
        %v608 = vpop.permute.xlu0 %607
        %609 = vrot.lane.b32.xlu0 %v604, 127
        %v610 = vpop.permute.xlu0 %609
        %vm611 = vcmp.lt.s32.totalorder %v299, 127
        %v612 = vsel %vm611, %v608, %v610
        %v613 = vsel %vm611, %v610, %v608
        %s614 = scalar_lea.vmem [#allocation5], 40
        %v615 = vld [vmem:[%s614] sm:$0xff]
        %617 = vst [vmem:[#allocation1] ss:$2 sm:$0xff] %v615
        %v618 = vld.sshfl [vmem:[#allocation1] sm:$0xff pattern:$0x75316420]
        %v619 = vld.sshfl [vmem:[#allocation1 + $0x8] sm:$0xff pattern:$0x75316420]
        %v622 = vmul.f32 %v612, %v618
        %v623 = vmul.f32 %v613, %v619
        %v624 = vld [vmem:[%s2] sm:$0xf]
        %626 = vset.pattern.permute.xlu0 20
        %627 = vperm.xlu0 %626, %v624
        %v628 = vpop.permute.xlu0 %627
        %v630 = vperm.slane %v622, 0
        %v631 = vperm.slane %v623, 0
        %v632 = vmul.f32 %v628, %v630
        %v633 = vmul.f32 %v628, %v631
        %v634 = vadd.f32 %v600, %v632
        %v635 = vadd.f32 %v601, %v633
        %636 = vset.pattern.permute.xlu0 21
        %637 = vperm.xlu0 %636, %v624
        %v638 = vpop.permute.xlu0 %637
        %v640 = vperm.slane %v622, 1
        %v641 = vperm.slane %v623, 1
        %v642 = vmul.f32 %v638, %v640
        %v643 = vmul.f32 %v638, %v641
        %v644 = vadd.f32 %v634, %v642
        %v645 = vadd.f32 %v635, %v643
        %646 = vset.pattern.permute.xlu0 22
        %647 = vperm.xlu0 %646, %v624
        %v648 = vpop.permute.xlu0 %647
        %v650 = vperm.slane %v622, 2
        %v651 = vperm.slane %v623, 2
        %v652 = vmul.f32 %v648, %v650
        %v653 = vmul.f32 %v648, %v651
        %v654 = vadd.f32 %v644, %v652
        %v655 = vadd.f32 %v645, %v653
        %656 = vset.pattern.permute.xlu0 23
        %657 = vperm.xlu0 %656, %v624
        %v658 = vpop.permute.xlu0 %657
        %v660 = vperm.slane %v622, 3
        %v661 = vperm.slane %v623, 3
        %v662 = vmul.f32 %v658, %v660
        %v663 = vmul.f32 %v658, %v661
        %v664 = vadd.f32 %v654, %v662
        %v665 = vadd.f32 %v655, %v663
        %666 = vst [vmem:[#allocation1] ss:$2 sm:$0xff] %v287
        %v667 = vld.sshfl [vmem:[#allocation1] sm:$0xff pattern:$0x75316420]
        %v668 = vld.sshfl [vmem:[#allocation1 + $0x8] sm:$0xff pattern:$0x75316420]
        %671 = vrot.lane.b32.xlu0 %v667, 113
        %v672 = vpop.permute.xlu0 %671
        %673 = vrot.lane.b32.xlu0 %v668, 113
        %v674 = vpop.permute.xlu0 %673
        %vm675 = vcmp.lt.s32.totalorder %v299, 113
        %v676 = vsel %vm675, %v672, %v674
        %v677 = vsel %vm675, %v674, %v672
        %s678 = scalar_lea.vmem [#allocation5], 48
        %v679 = vld [vmem:[%s678] sm:$0xff]
        %681 = vst [vmem:[#allocation1] ss:$2 sm:$0xff] %v679
        %v682 = vld.sshfl [vmem:[#allocation1] sm:$0xff pattern:$0x75316420]
        %v683 = vld.sshfl [vmem:[#allocation1 + $0x8] sm:$0xff pattern:$0x75316420]
        %v686 = vmul.f32 %v676, %v682
        %v687 = vmul.f32 %v677, %v683
        %v688 = vld [vmem:[%s2] sm:$0xf]
        %690 = vset.pattern.permute.xlu0 24
        %691 = vperm.xlu0 %690, %v688
        %v692 = vpop.permute.xlu0 %691
        %v694 = vperm.slane %v686, 0
        %v695 = vperm.slane %v687, 0
        %v696 = vmul.f32 %v692, %v694
        %v697 = vmul.f32 %v692, %v695
        %v698 = vadd.f32 %v664, %v696
        %v699 = vadd.f32 %v665, %v697
        %700 = vset.pattern.permute.xlu0 25
        %701 = vperm.xlu0 %700, %v688
        %v702 = vpop.permute.xlu0 %701
        %v704 = vperm.slane %v686, 1
        %v705 = vperm.slane %v687, 1
        %v706 = vmul.f32 %v702, %v704
        %v707 = vmul.f32 %v702, %v705
        %v708 = vadd.f32 %v698, %v706
        %v709 = vadd.f32 %v699, %v707
        %710 = vset.pattern.permute.xlu0 26
        %711 = vperm.xlu0 %710, %v688
        %v712 = vpop.permute.xlu0 %711
        %v714 = vperm.slane %v686, 2
        %v715 = vperm.slane %v687, 2
        %v716 = vmul.f32 %v712, %v714
        %v717 = vmul.f32 %v712, %v715
        %v718 = vadd.f32 %v708, %v716
        %v719 = vadd.f32 %v709, %v717
        %720 = vset.pattern.permute.xlu0 27
        %721 = vperm.xlu0 %720, %v688
        %v722 = vpop.permute.xlu0 %721
        %v724 = vperm.slane %v686, 3
        %v725 = vperm.slane %v687, 3
        %v726 = vmul.f32 %v722, %v724
        %v727 = vmul.f32 %v722, %v725
        %v728 = vadd.f32 %v718, %v726
        %v729 = vadd.f32 %v719, %v727
        %730 = vst [vmem:[#allocation1] ss:$2 sm:$0xff] %v287
        %v731 = vld.sshfl [vmem:[#allocation1] sm:$0xff pattern:$0x75316420]
        %v732 = vld.sshfl [vmem:[#allocation1 + $0x8] sm:$0xff pattern:$0x75316420]
        %735 = vrot.lane.b32.xlu0 %v731, 112
        %v736 = vpop.permute.xlu0 %735
        %737 = vrot.lane.b32.xlu0 %v732, 112
        %v738 = vpop.permute.xlu0 %737
        %vm739 = vcmp.lt.s32.totalorder %v299, 112
        %v740 = vsel %vm739, %v736, %v738
        %v741 = vsel %vm739, %v738, %v736
        %s742 = scalar_lea.vmem [#allocation5], 56
        %v743 = vld [vmem:[%s742] sm:$0xff]
        %745 = vst [vmem:[#allocation1] ss:$2 sm:$0xff] %v743
        %v746 = vld.sshfl [vmem:[#allocation1] sm:$0xff pattern:$0x75316420]
        %v747 = vld.sshfl [vmem:[#allocation1 + $0x8] sm:$0xff pattern:$0x75316420]
        %v750 = vmul.f32 %v740, %v746
        %v751 = vmul.f32 %v741, %v747
        %v752 = vld [vmem:[%s2] sm:$0xf]
        %754 = vset.pattern.permute.xlu0 28
        %755 = vperm.xlu0 %754, %v752
        %v756 = vpop.permute.xlu0 %755
        %v758 = vperm.slane %v750, 0
        %v759 = vperm.slane %v751, 0
        %v760 = vmul.f32 %v756, %v758
        %v761 = vmul.f32 %v756, %v759
        %v762 = vadd.f32 %v728, %v760
        %v763 = vadd.f32 %v729, %v761
        %764 = vset.pattern.permute.xlu0 29
        %765 = vperm.xlu0 %764, %v752
        %v766 = vpop.permute.xlu0 %765
        %v768 = vperm.slane %v750, 1
        %v769 = vperm.slane %v751, 1
        %v770 = vmul.f32 %v766, %v768
        %v771 = vmul.f32 %v766, %v769
        %v772 = vadd.f32 %v762, %v770
        %v773 = vadd.f32 %v763, %v771
        %774 = vset.pattern.permute.xlu0 30
        %775 = vperm.xlu0 %774, %v752
        %v776 = vpop.permute.xlu0 %775
        %v778 = vperm.slane %v750, 2
        %v779 = vperm.slane %v751, 2
        %v780 = vmul.f32 %v776, %v778
        %v781 = vmul.f32 %v776, %v779
        %v782 = vadd.f32 %v772, %v780
        %v783 = vadd.f32 %v773, %v781
        %784 = vset.pattern.permute.xlu0 31
        %785 = vperm.xlu0 %784, %v752
        %v786 = vpop.permute.xlu0 %785
        %v788 = vperm.slane %v750, 3
        %v789 = vperm.slane %v751, 3
        %v790 = vmul.f32 %v786, %v788
        %v791 = vmul.f32 %v786, %v789
        %v792 = vadd.f32 %v782, %v790
        %v793 = vadd.f32 %v783, %v791
        %794 = vst [vmem:[#allocation1] ss:$2 sm:$0xff] %v287
        %v795 = vld.sshfl [vmem:[#allocation1] sm:$0xff pattern:$0x75316420]
        %v796 = vld.sshfl [vmem:[#allocation1 + $0x8] sm:$0xff pattern:$0x75316420]
        %799 = vrot.lane.b32.xlu0 %v795, 111
        %v800 = vpop.permute.xlu0 %799
        %801 = vrot.lane.b32.xlu0 %v796, 111
        %v802 = vpop.permute.xlu0 %801
        %vm803 = vcmp.lt.s32.totalorder %v299, 111
        %v804 = vsel %vm803, %v800, %v802
        %v805 = vsel %vm803, %v802, %v800
        %s806 = scalar_lea.vmem [#allocation5], 64
        %v807 = vld [vmem:[%s806] sm:$0xff]
        %809 = vst [vmem:[#allocation1] ss:$2 sm:$0xff] %v807
        %v810 = vld.sshfl [vmem:[#allocation1] sm:$0xff pattern:$0x75316420]
        %v811 = vld.sshfl [vmem:[#allocation1 + $0x8] sm:$0xff pattern:$0x75316420]
        %v814 = vmul.f32 %v804, %v810
        %v815 = vmul.f32 %v805, %v811
        %v816 = vld [vmem:[%s2] sm:$0xf]
        %818 = vset.pattern.permute.xlu0 32
        %819 = vperm.xlu0 %818, %v816
        %v820 = vpop.permute.xlu0 %819
        %v822 = vperm.slane %v814, 0
        %v823 = vperm.slane %v815, 0
        %v824 = vmul.f32 %v820, %v822
        %v825 = vmul.f32 %v820, %v823
        %v826 = vadd.f32 %v792, %v824
        %v827 = vadd.f32 %v793, %v825
        %828 = vset.pattern.permute.xlu0 33
        %829 = vperm.xlu0 %828, %v816
        %v830 = vpop.permute.xlu0 %829
        %v832 = vperm.slane %v814, 1
        %v833 = vperm.slane %v815, 1
        %v834 = vmul.f32 %v830, %v832
        %v835 = vmul.f32 %v830, %v833
        %v836 = vadd.f32 %v826, %v834
        %v837 = vadd.f32 %v827, %v835
        %838 = vset.pattern.permute.xlu0 34
        %839 = vperm.xlu0 %838, %v816
        %v840 = vpop.permute.xlu0 %839
        %v842 = vperm.slane %v814, 2
        %v843 = vperm.slane %v815, 2
        %v844 = vmul.f32 %v840, %v842
        %v845 = vmul.f32 %v840, %v843
        %v846 = vadd.f32 %v836, %v844
        %v847 = vadd.f32 %v837, %v845
        %848 = vset.pattern.permute.xlu0 35
        %849 = vperm.xlu0 %848, %v816
        %v850 = vpop.permute.xlu0 %849
        %v852 = vperm.slane %v814, 3
        %v853 = vperm.slane %v815, 3
        %v854 = vmul.f32 %v850, %v852
        %v855 = vmul.f32 %v850, %v853
        %v856 = vadd.f32 %v846, %v854
        %v857 = vadd.f32 %v847, %v855
        %v858 = vld [vmem:[%s3] sm:$0xf]
        %860 = vset.pattern.permute.xlu0 0
        %861 = vperm.xlu0 %860, %v858
        %v862 = vpop.permute.xlu0 %861
        %v864 = vadd.f32 %v856, %v862
        %v865 = vadd.f32 %v857, %v862
        %v866 = vmax.f32 %v864, 0.0
        %v867 = vmax.f32 %v865, 0.0
        %868 = vrot.lane.b32.xlu0 %v866, 17
        %v869 = vpop.permute.xlu0 %868
        %870 = vrot.lane.b32.xlu0 %v867, 17
        %v871 = vpop.permute.xlu0 %870
        %v872 = vsel %vm300, %v869, %v871
        %v873 = vsel %vm300, %v871, %v869
        %874 = vst [vmem:[#allocation1] ss:$2 sm:$0xff] %v303
        %v875 = vld.sshfl [vmem:[#allocation1] sm:$0xff pattern:$0x75316420]
        %v876 = vld.sshfl [vmem:[#allocation1 + $0x8] sm:$0xff pattern:$0x75316420]
        %v879 = vmul.f32 %v873, %v875
        %v880 = vmul.f32 %v872, %v876
        %v881 = vld [vmem:[%s4] sm:$0xf]
        %883 = vset.pattern.permute.xlu0 0
        %884 = vperm.xlu0 %883, %v881
        %v885 = vpop.permute.xlu0 %884
        %v887 = vperm.slane %v879, 0
        %v888 = vperm.slane %v880, 0
        %v889 = vmul.f32 %v885, %v887
        %v890 = vmul.f32 %v885, %v888
        %v891 = vadd.f32 %v889, 0.0
        %v892 = vadd.f32 %v890, 0.0
        %893 = vset.pattern.permute.xlu0 1
        %894 = vperm.xlu0 %893, %v881
        %v895 = vpop.permute.xlu0 %894
        %v897 = vperm.slane %v879, 1
        %v898 = vperm.slane %v880, 1
        %v899 = vmul.f32 %v895, %v897
        %v900 = vmul.f32 %v895, %v898
        %v901 = vadd.f32 %v891, %v899
        %v902 = vadd.f32 %v892, %v900
        %903 = vset.pattern.permute.xlu0 2
        %904 = vperm.xlu0 %903, %v881
        %v905 = vpop.permute.xlu0 %904
        %v907 = vperm.slane %v879, 2
        %v908 = vperm.slane %v880, 2
        %v909 = vmul.f32 %v905, %v907
        %v910 = vmul.f32 %v905, %v908
        %v911 = vadd.f32 %v901, %v909
        %v912 = vadd.f32 %v902, %v910
        %913 = vset.pattern.permute.xlu0 3
        %914 = vperm.xlu0 %913, %v881
        %v915 = vpop.permute.xlu0 %914
        %v917 = vperm.slane %v879, 3
        %v918 = vperm.slane %v880, 3
        %v919 = vmul.f32 %v915, %v917
        %v920 = vmul.f32 %v915, %v918
        %v921 = vadd.f32 %v911, %v919
        %v922 = vadd.f32 %v912, %v920
        %923 = vrot.lane.b32.xlu0 %v866, 16
        %v924 = vpop.permute.xlu0 %923
        %925 = vrot.lane.b32.xlu0 %v867, 16
        %v926 = vpop.permute.xlu0 %925
        %v927 = vsel %vm363, %v924, %v926
        %v928 = vsel %vm363, %v926, %v924
        %929 = vst [vmem:[#allocation1] ss:$2 sm:$0xff] %v367
        %v930 = vld.sshfl [vmem:[#allocation1] sm:$0xff pattern:$0x75316420]
        %v931 = vld.sshfl [vmem:[#allocation1 + $0x8] sm:$0xff pattern:$0x75316420]
        %v934 = vmul.f32 %v928, %v930
        %v935 = vmul.f32 %v927, %v931
        %v936 = vld [vmem:[%s4] sm:$0xf]
        %938 = vset.pattern.permute.xlu0 4
        %939 = vperm.xlu0 %938, %v936
        %v940 = vpop.permute.xlu0 %939
        %v942 = vperm.slane %v934, 0
        %v943 = vperm.slane %v935, 0
        %v944 = vmul.f32 %v940, %v942
        %v945 = vmul.f32 %v940, %v943
        %v946 = vadd.f32 %v921, %v944
        %v947 = vadd.f32 %v922, %v945
        %948 = vset.pattern.permute.xlu0 5
        %949 = vperm.xlu0 %948, %v936
        %v950 = vpop.permute.xlu0 %949
        %v952 = vperm.slane %v934, 1
        %v953 = vperm.slane %v935, 1
        %v954 = vmul.f32 %v950, %v952
        %v955 = vmul.f32 %v950, %v953
        %v956 = vadd.f32 %v946, %v954
        %v957 = vadd.f32 %v947, %v955
        %958 = vset.pattern.permute.xlu0 6
        %959 = vperm.xlu0 %958, %v936
        %v960 = vpop.permute.xlu0 %959
        %v962 = vperm.slane %v934, 2
        %v963 = vperm.slane %v935, 2
        %v964 = vmul.f32 %v960, %v962
        %v965 = vmul.f32 %v960, %v963
        %v966 = vadd.f32 %v956, %v964
        %v967 = vadd.f32 %v957, %v965
        %968 = vset.pattern.permute.xlu0 7
        %969 = vperm.xlu0 %968, %v936
        %v970 = vpop.permute.xlu0 %969
        %v972 = vperm.slane %v934, 3
        %v973 = vperm.slane %v935, 3
        %v974 = vmul.f32 %v970, %v972
        %v975 = vmul.f32 %v970, %v973
        %v976 = vadd.f32 %v966, %v974
        %v977 = vadd.f32 %v967, %v975
        %978 = vrot.lane.b32.xlu0 %v866, 15
        %v979 = vpop.permute.xlu0 %978
        %980 = vrot.lane.b32.xlu0 %v867, 15
        %v981 = vpop.permute.xlu0 %980
        %v982 = vsel %vm427, %v979, %v981
        %v983 = vsel %vm427, %v981, %v979
        %984 = vst [vmem:[#allocation1] ss:$2 sm:$0xff] %v431
        %v985 = vld.sshfl [vmem:[#allocation1] sm:$0xff pattern:$0x75316420]
        %v986 = vld.sshfl [vmem:[#allocation1 + $0x8] sm:$0xff pattern:$0x75316420]
        %v989 = vmul.f32 %v983, %v985
        %v990 = vmul.f32 %v982, %v986
        %v991 = vld [vmem:[%s4] sm:$0xf]
        %993 = vset.pattern.permute.xlu0 8
        %994 = vperm.xlu0 %993, %v991
        %v995 = vpop.permute.xlu0 %994
        %v997 = vperm.slane %v989, 0
        %v998 = vperm.slane %v990, 0
        %v999 = vmul.f32 %v995, %v997
        %v1000 = vmul.f32 %v995, %v998
        %v1001 = vadd.f32 %v976, %v999
        %v1002 = vadd.f32 %v977, %v1000
        %1003 = vset.pattern.permute.xlu0 9
        %1004 = vperm.xlu0 %1003, %v991
        %v1005 = vpop.permute.xlu0 %1004
        %v1007 = vperm.slane %v989, 1
        %v1008 = vperm.slane %v990, 1
        %v1009 = vmul.f32 %v1005, %v1007
        %v1010 = vmul.f32 %v1005, %v1008
        %v1011 = vadd.f32 %v1001, %v1009
        %v1012 = vadd.f32 %v1002, %v1010
        %1013 = vset.pattern.permute.xlu0 10
        %1014 = vperm.xlu0 %1013, %v991
        %v1015 = vpop.permute.xlu0 %1014
        %v1017 = vperm.slane %v989, 2
        %v1018 = vperm.slane %v990, 2
        %v1019 = vmul.f32 %v1015, %v1017
        %v1020 = vmul.f32 %v1015, %v1018
        %v1021 = vadd.f32 %v1011, %v1019
        %v1022 = vadd.f32 %v1012, %v1020
        %1023 = vset.pattern.permute.xlu0 11
        %1024 = vperm.xlu0 %1023, %v991
        %v1025 = vpop.permute.xlu0 %1024
        %v1027 = vperm.slane %v989, 3
        %v1028 = vperm.slane %v990, 3
        %v1029 = vmul.f32 %v1025, %v1027
        %v1030 = vmul.f32 %v1025, %v1028
        %v1031 = vadd.f32 %v1021, %v1029
        %v1032 = vadd.f32 %v1022, %v1030
        %1033 = vrot.lane.b32.xlu0 %v866, 1
        %v1034 = vpop.permute.xlu0 %1033
        %1035 = vrot.lane.b32.xlu0 %v867, 1
        %v1036 = vpop.permute.xlu0 %1035
        %v1037 = vsel %vm491, %v1034, %v1036
        %v1038 = vsel %vm491, %v1036, %v1034
        %1039 = vst [vmem:[#allocation1] ss:$2 sm:$0xff] %v495
        %v1040 = vld.sshfl [vmem:[#allocation1] sm:$0xff pattern:$0x75316420]
        %v1041 = vld.sshfl [vmem:[#allocation1 + $0x8] sm:$0xff pattern:$0x75316420]
        %v1044 = vmul.f32 %v1038, %v1040
        %v1045 = vmul.f32 %v1037, %v1041
        %v1046 = vld [vmem:[%s4] sm:$0xf]
        %1048 = vset.pattern.permute.xlu0 12
        %1049 = vperm.xlu0 %1048, %v1046
        %v1050 = vpop.permute.xlu0 %1049
        %v1052 = vperm.slane %v1044, 0
        %v1053 = vperm.slane %v1045, 0
        %v1054 = vmul.f32 %v1050, %v1052
        %v1055 = vmul.f32 %v1050, %v1053
        %v1056 = vadd.f32 %v1031, %v1054
        %v1057 = vadd.f32 %v1032, %v1055
        %1058 = vset.pattern.permute.xlu0 13
        %1059 = vperm.xlu0 %1058, %v1046
        %v1060 = vpop.permute.xlu0 %1059
        %v1062 = vperm.slane %v1044, 1
        %v1063 = vperm.slane %v1045, 1
        %v1064 = vmul.f32 %v1060, %v1062
        %v1065 = vmul.f32 %v1060, %v1063
        %v1066 = vadd.f32 %v1056, %v1064
        %v1067 = vadd.f32 %v1057, %v1065
        %1068 = vset.pattern.permute.xlu0 14
        %1069 = vperm.xlu0 %1068, %v1046
        %v1070 = vpop.permute.xlu0 %1069
        %v1072 = vperm.slane %v1044, 2
        %v1073 = vperm.slane %v1045, 2
        %v1074 = vmul.f32 %v1070, %v1072
        %v1075 = vmul.f32 %v1070, %v1073
        %v1076 = vadd.f32 %v1066, %v1074
        %v1077 = vadd.f32 %v1067, %v1075
        %1078 = vset.pattern.permute.xlu0 15
        %1079 = vperm.xlu0 %1078, %v1046
        %v1080 = vpop.permute.xlu0 %1079
        %v1082 = vperm.slane %v1044, 3
        %v1083 = vperm.slane %v1045, 3
        %v1084 = vmul.f32 %v1080, %v1082
        %v1085 = vmul.f32 %v1080, %v1083
        %v1086 = vadd.f32 %v1076, %v1084
        %v1087 = vadd.f32 %v1077, %v1085
        %1088 = vset.pattern.permute.xlu0 16
        %1089 = vperm.xlu0 %1088, %v1046
        %v1090 = vpop.permute.xlu0 %1089
        %v1092 = vperm.slane %v866, 0
        %v1093 = vperm.slane %v867, 0
        %v1094 = vmul.f32 %v1090, %v1092
        %v1095 = vmul.f32 %v1090, %v1093
        %v1096 = vadd.f32 %v1086, %v1094
        %v1097 = vadd.f32 %v1087, %v1095
        %1098 = vset.pattern.permute.xlu0 17
        %1099 = vperm.xlu0 %1098, %v1046
        %v1100 = vpop.permute.xlu0 %1099
        %v1102 = vperm.slane %v866, 1
        %v1103 = vperm.slane %v867, 1
        %v1104 = vmul.f32 %v1100, %v1102
        %v1105 = vmul.f32 %v1100, %v1103
        %v1106 = vadd.f32 %v1096, %v1104
        %v1107 = vadd.f32 %v1097, %v1105
        %1108 = vset.pattern.permute.xlu0 18
        %1109 = vperm.xlu0 %1108, %v1046
        %v1110 = vpop.permute.xlu0 %1109
        %v1112 = vperm.slane %v866, 2
        %v1113 = vperm.slane %v867, 2
        %v1114 = vmul.f32 %v1110, %v1112
        %v1115 = vmul.f32 %v1110, %v1113
        %v1116 = vadd.f32 %v1106, %v1114
        %v1117 = vadd.f32 %v1107, %v1115
        %1118 = vset.pattern.permute.xlu0 19
        %1119 = vperm.xlu0 %1118, %v1046
        %v1120 = vpop.permute.xlu0 %1119
        %v1122 = vperm.slane %v866, 3
        %v1123 = vperm.slane %v867, 3
        %v1124 = vmul.f32 %v1120, %v1122
        %v1125 = vmul.f32 %v1120, %v1123
        %v1126 = vadd.f32 %v1116, %v1124
        %v1127 = vadd.f32 %v1117, %v1125
        %1128 = vrot.lane.b32.xlu0 %v866, 127
        %v1129 = vpop.permute.xlu0 %1128
        %1130 = vrot.lane.b32.xlu0 %v867, 127
        %v1131 = vpop.permute.xlu0 %1130
        %v1132 = vsel %vm611, %v1129, %v1131
        %v1133 = vsel %vm611, %v1131, %v1129
        %1134 = vst [vmem:[#allocation1] ss:$2 sm:$0xff] %v615
        %v1135 = vld.sshfl [vmem:[#allocation1] sm:$0xff pattern:$0x75316420]
        %v1136 = vld.sshfl [vmem:[#allocation1 + $0x8] sm:$0xff pattern:$0x75316420]
        %v1139 = vmul.f32 %v1132, %v1135
        %v1140 = vmul.f32 %v1133, %v1136
        %v1141 = vld [vmem:[%s4] sm:$0xf]
        %1143 = vset.pattern.permute.xlu0 20
        %1144 = vperm.xlu0 %1143, %v1141
        %v1145 = vpop.permute.xlu0 %1144
        %v1147 = vperm.slane %v1139, 0
        %v1148 = vperm.slane %v1140, 0
        %v1149 = vmul.f32 %v1145, %v1147
        %v1150 = vmul.f32 %v1145, %v1148
        %v1151 = vadd.f32 %v1126, %v1149
        %v1152 = vadd.f32 %v1127, %v1150
        %1153 = vset.pattern.permute.xlu0 21
        %1154 = vperm.xlu0 %1153, %v1141
        %v1155 = vpop.permute.xlu0 %1154
        %v1157 = vperm.slane %v1139, 1
        %v1158 = vperm.slane %v1140, 1
        %v1159 = vmul.f32 %v1155, %v1157
        %v1160 = vmul.f32 %v1155, %v1158
        %v1161 = vadd.f32 %v1151, %v1159
        %v1162 = vadd.f32 %v1152, %v1160
        %1163 = vset.pattern.permute.xlu0 22
        %1164 = vperm.xlu0 %1163, %v1141
        %v1165 = vpop.permute.xlu0 %1164
        %v1167 = vperm.slane %v1139, 2
        %v1168 = vperm.slane %v1140, 2
        %v1169 = vmul.f32 %v1165, %v1167
        %v1170 = vmul.f32 %v1165, %v1168
        %v1171 = vadd.f32 %v1161, %v1169
        %v1172 = vadd.f32 %v1162, %v1170
        %1173 = vset.pattern.permute.xlu0 23
        %1174 = vperm.xlu0 %1173, %v1141
        %v1175 = vpop.permute.xlu0 %1174
        %v1177 = vperm.slane %v1139, 3
        %v1178 = vperm.slane %v1140, 3
        %v1179 = vmul.f32 %v1175, %v1177
        %v1180 = vmul.f32 %v1175, %v1178
        %v1181 = vadd.f32 %v1171, %v1179
        %v1182 = vadd.f32 %v1172, %v1180
        %1183 = vrot.lane.b32.xlu0 %v866, 113
        %v1184 = vpop.permute.xlu0 %1183
        %1185 = vrot.lane.b32.xlu0 %v867, 113
        %v1186 = vpop.permute.xlu0 %1185
        %v1187 = vsel %vm675, %v1184, %v1186
        %v1188 = vsel %vm675, %v1186, %v1184
        %1189 = vst [vmem:[#allocation1] ss:$2 sm:$0xff] %v679
        %v1190 = vld.sshfl [vmem:[#allocation1] sm:$0xff pattern:$0x75316420]
        %v1191 = vld.sshfl [vmem:[#allocation1 + $0x8] sm:$0xff pattern:$0x75316420]
        %v1194 = vmul.f32 %v1187, %v1190
        %v1195 = vmul.f32 %v1188, %v1191
        %v1196 = vld [vmem:[%s4] sm:$0xf]
        %1198 = vset.pattern.permute.xlu0 24
        %1199 = vperm.xlu0 %1198, %v1196
        %v1200 = vpop.permute.xlu0 %1199
        %v1202 = vperm.slane %v1194, 0
        %v1203 = vperm.slane %v1195, 0
        %v1204 = vmul.f32 %v1200, %v1202
        %v1205 = vmul.f32 %v1200, %v1203
        %v1206 = vadd.f32 %v1181, %v1204
        %v1207 = vadd.f32 %v1182, %v1205
        %1208 = vset.pattern.permute.xlu0 25
        %1209 = vperm.xlu0 %1208, %v1196
        %v1210 = vpop.permute.xlu0 %1209
        %v1212 = vperm.slane %v1194, 1
        %v1213 = vperm.slane %v1195, 1
        %v1214 = vmul.f32 %v1210, %v1212
        %v1215 = vmul.f32 %v1210, %v1213
        %v1216 = vadd.f32 %v1206, %v1214
        %v1217 = vadd.f32 %v1207, %v1215
        %1218 = vset.pattern.permute.xlu0 26
        %1219 = vperm.xlu0 %1218, %v1196
        %v1220 = vpop.permute.xlu0 %1219
        %v1222 = vperm.slane %v1194, 2
        %v1223 = vperm.slane %v1195, 2
        %v1224 = vmul.f32 %v1220, %v1222
        %v1225 = vmul.f32 %v1220, %v1223
        %v1226 = vadd.f32 %v1216, %v1224
        %v1227 = vadd.f32 %v1217, %v1225
        %1228 = vset.pattern.permute.xlu0 27
        %1229 = vperm.xlu0 %1228, %v1196
        %v1230 = vpop.permute.xlu0 %1229
        %v1232 = vperm.slane %v1194, 3
        %v1233 = vperm.slane %v1195, 3
        %v1234 = vmul.f32 %v1230, %v1232
        %v1235 = vmul.f32 %v1230, %v1233
        %v1236 = vadd.f32 %v1226, %v1234
        %v1237 = vadd.f32 %v1227, %v1235
        %1238 = vrot.lane.b32.xlu0 %v866, 112
        %v1239 = vpop.permute.xlu0 %1238
        %1240 = vrot.lane.b32.xlu0 %v867, 112
        %v1241 = vpop.permute.xlu0 %1240
        %v1242 = vsel %vm739, %v1239, %v1241
        %v1243 = vsel %vm739, %v1241, %v1239
        %1244 = vst [vmem:[#allocation1] ss:$2 sm:$0xff] %v743
        %v1245 = vld.sshfl [vmem:[#allocation1] sm:$0xff pattern:$0x75316420]
        %v1246 = vld.sshfl [vmem:[#allocation1 + $0x8] sm:$0xff pattern:$0x75316420]
        %v1249 = vmul.f32 %v1242, %v1245
        %v1250 = vmul.f32 %v1243, %v1246
        %v1251 = vld [vmem:[%s4] sm:$0xf]
        %1253 = vset.pattern.permute.xlu0 28
        %1254 = vperm.xlu0 %1253, %v1251
        %v1255 = vpop.permute.xlu0 %1254
        %v1257 = vperm.slane %v1249, 0
        %v1258 = vperm.slane %v1250, 0
        %v1259 = vmul.f32 %v1255, %v1257
        %v1260 = vmul.f32 %v1255, %v1258
        %v1261 = vadd.f32 %v1236, %v1259
        %v1262 = vadd.f32 %v1237, %v1260
        %1263 = vset.pattern.permute.xlu0 29
        %1264 = vperm.xlu0 %1263, %v1251
        %v1265 = vpop.permute.xlu0 %1264
        %v1267 = vperm.slane %v1249, 1
        %v1268 = vperm.slane %v1250, 1
        %v1269 = vmul.f32 %v1265, %v1267
        %v1270 = vmul.f32 %v1265, %v1268
        %v1271 = vadd.f32 %v1261, %v1269
        %v1272 = vadd.f32 %v1262, %v1270
        %1273 = vset.pattern.permute.xlu0 30
        %1274 = vperm.xlu0 %1273, %v1251
        %v1275 = vpop.permute.xlu0 %1274
        %v1277 = vperm.slane %v1249, 2
        %v1278 = vperm.slane %v1250, 2
        %v1279 = vmul.f32 %v1275, %v1277
        %v1280 = vmul.f32 %v1275, %v1278
        %v1281 = vadd.f32 %v1271, %v1279
        %v1282 = vadd.f32 %v1272, %v1280
        %1283 = vset.pattern.permute.xlu0 31
        %1284 = vperm.xlu0 %1283, %v1251
        %v1285 = vpop.permute.xlu0 %1284
        %v1287 = vperm.slane %v1249, 3
        %v1288 = vperm.slane %v1250, 3
        %v1289 = vmul.f32 %v1285, %v1287
        %v1290 = vmul.f32 %v1285, %v1288
        %v1291 = vadd.f32 %v1281, %v1289
        %v1292 = vadd.f32 %v1282, %v1290
        %1293 = vrot.lane.b32.xlu0 %v866, 111
        %v1294 = vpop.permute.xlu0 %1293
        %1295 = vrot.lane.b32.xlu0 %v867, 111
        %v1296 = vpop.permute.xlu0 %1295
        %v1297 = vsel %vm803, %v1294, %v1296
        %v1298 = vsel %vm803, %v1296, %v1294
        %1299 = vst [vmem:[#allocation1] ss:$2 sm:$0xff] %v807
        %v1300 = vld.sshfl [vmem:[#allocation1] sm:$0xff pattern:$0x75316420]
        %v1301 = vld.sshfl [vmem:[#allocation1 + $0x8] sm:$0xff pattern:$0x75316420]
        %v1304 = vmul.f32 %v1297, %v1300
        %v1305 = vmul.f32 %v1298, %v1301
        %v1306 = vld [vmem:[%s4] sm:$0xf]
        %1308 = vset.pattern.permute.xlu0 32
        %1309 = vperm.xlu0 %1308, %v1306
        %v1310 = vpop.permute.xlu0 %1309
        %v1312 = vperm.slane %v1304, 0
        %v1313 = vperm.slane %v1305, 0
        %v1314 = vmul.f32 %v1310, %v1312
        %v1315 = vmul.f32 %v1310, %v1313
        %v1316 = vadd.f32 %v1291, %v1314
        %v1317 = vadd.f32 %v1292, %v1315
        %1318 = vset.pattern.permute.xlu0 33
        %1319 = vperm.xlu0 %1318, %v1306
        %v1320 = vpop.permute.xlu0 %1319
        %v1322 = vperm.slane %v1304, 1
        %v1323 = vperm.slane %v1305, 1
        %v1324 = vmul.f32 %v1320, %v1322
        %v1325 = vmul.f32 %v1320, %v1323
        %v1326 = vadd.f32 %v1316, %v1324
        %v1327 = vadd.f32 %v1317, %v1325
        %1328 = vset.pattern.permute.xlu0 34
        %1329 = vperm.xlu0 %1328, %v1306
        %v1330 = vpop.permute.xlu0 %1329
        %v1332 = vperm.slane %v1304, 2
        %v1333 = vperm.slane %v1305, 2
        %v1334 = vmul.f32 %v1330, %v1332
        %v1335 = vmul.f32 %v1330, %v1333
        %v1336 = vadd.f32 %v1326, %v1334
        %v1337 = vadd.f32 %v1327, %v1335
        %1338 = vset.pattern.permute.xlu0 35
        %1339 = vperm.xlu0 %1338, %v1306
        %v1340 = vpop.permute.xlu0 %1339
        %v1342 = vperm.slane %v1304, 3
        %v1343 = vperm.slane %v1305, 3
        %v1344 = vmul.f32 %v1340, %v1342
        %v1345 = vmul.f32 %v1340, %v1343
        %v1346 = vadd.f32 %v1336, %v1344
        %v1347 = vadd.f32 %v1337, %v1345
        %v1348 = vld [vmem:[%s5] sm:$0xf]
        %1350 = vset.pattern.permute.xlu0 0
        %1351 = vperm.xlu0 %1350, %v1348
        %v1352 = vpop.permute.xlu0 %1351
        %v1354 = vadd.f32 %v1346, %v1352
        %v1355 = vadd.f32 %v1347, %v1352
        %v1358 = vrot.slane %v1355, 4
        %vm1359 = vcmask 1043456
        %v1360 = vsel %vm1359, %v1354, %v1358
        %v1362 = vadd.f32 %v287, %v1360
        %1363 = vst [vmem:[%s286] sm:$0xff] %v1362
        %s1364 = sand.u32 %s163, 1
        %s1365 = scalar_lea.sflag [#allocation4], %s1364
        %s1366 = sand.u32 %s163, 1
        %s1367 = smul.addr %s1366, 8
        %s1368 = scalar_lea.vmem [#allocation7], %s1367
        // Predicated region
        $region53: #{tpu_custom_call.1} parent=43 // pred_check
          %p1369 = pneg %p173
        $region54: #{tpu_custom_call.1} parent=43 // pred_check_branch
          %1371 = sbr.rel (%p1369) target = $region56
        $region55: #{tpu_custom_call.1} parent=43 // pred_region
          %1373 = vsyncadd %s1365, 0
          %s1374 = smul.addr %s24, 2
          %s1375 = smul.addr %s1374, 4
          %s1376 = scalar_lea.hbm %s6, %s1375
          %s1378 = sshll.u32 %s1368, 4
          %s1379 = int_to_ptr.vmem [resolvable:$true] %s1378
          %s1380 = sshll.u32 %s1376, 4
          %s1381 = int_to_ptr.hbm [resolvable:$true] %s1380
          %1383 = dma.vmem_to_hbm [thread:$0]  %s1379, 128, %s1381, %s1365
        $region56: #{tpu_custom_call.1} parent=43 // pred_fallthru
          _
      $region44: #{tpu_custom_call.1} parent=5 // pred_fallthru
        _
      %p1384 = scmp.le.s32.totalorder 2, %s19
      // Predicated region
      $region57: #{tpu_custom_call.1} parent=5 // pred_check
        %p1385 = pneg %p1384
      $region58: #{tpu_custom_call.1} parent=5 // pred_check_branch
        %1387 = sbr.rel (%p1385) target = $region60
      $region59: #{tpu_custom_call.1} parent=5 // pred_region
        %s1388 = ssub.s32 %s19, 2
        // Predicated region
        $region61: #{tpu_custom_call.1} parent=59 // pred_check
          %p1389 = pneg %p179
        $region62: #{tpu_custom_call.1} parent=59 // pred_check_branch
          %1391 = sbr.rel (%p1389) target = $region64
        $region63: #{tpu_custom_call.1} parent=59 // pred_region
          %s1392 = sand.u32 %s164, 1
          %s1393 = scalar_lea.sflag [#allocation4], %s1392
          %s1394 = sand.u32 %s164, 1
          %s1395 = smul.addr %s1394, 8
          %s1396 = scalar_lea.vmem [#allocation7], %s1395
          %1398 = dma.done %s1393, 128
        $region64: #{tpu_custom_call.1} parent=59 // pred_fallthru
          _
      $region60: #{tpu_custom_call.1} parent=5 // pred_fallthru
        _
    $region6: #{tpu_custom_call.1} parent=1 // loop_footer
      %s23 = sadd.s32 1, %s19
    $region7: #{tpu_custom_call.1} parent=1 // loop_footer_branch
      %18 = sbr.rel target = $region3
    $region8: #{tpu_custom_call.1} parent=1 // loop_exit
      _
    %1399 = vsyncpa [#allocation3], 1
    %s1400 = scalar_lea.sflag [#allocation3], 1
    %1401 = vsyncpa %s1400, 1
    %1402 = vsyncpa [#allocation6], 1
    %1403 = vsyncpa [#allocation4], 1
    %s1404 = scalar_lea.sflag [#allocation4], 1
    %1405 = vsyncpa %s1404, 1

</llo_original>
